<compile_context>
chip_gen: v6e
topology: v6e:2x2x1
jax: 0.10.0
libtpu: 0.0.40
codegen_flags: <defaults>
</compile_context>

<pallas_src>
import jax
import jax.numpy as jnp
from jax.experimental import pallas as pl
from jax.experimental.pallas import tpu as pltpu


def _lstm_asc_kernel(
    x_ref,        # (N, d_in)
    win_ref,      # (d_in, 4H + H)  packed [W_ih(i|f|g|o) | W_skip]
    bin_ref,      # (1,   4H + H)   packed [b_ih + b_hh (i|f|g|o) | b_skip]
    whh_ref,      # (H, 4H)         packed hidden->hidden weights, gate order [i | f | g | o]
    h0_ref,       # (1, H)          init_hidden parameter
    c0_ref,       # (1, H)          init_cell parameter
    w1_ref,       # (H, ds_hid)     classifier hidden layer (transposed)
    b1_ref,       # (1, ds_hid)
    w2_ref,       # (ds_hid, n_classes)
    b2_ref,       # (1, n_classes)
    pred_ref,     # out: (N, n_classes)  instance predictions
    bag_ref,      # out: (1, n_classes)  bag prediction (mean over instances)
):
    n = x_ref.shape[0]
    h_dim = h0_ref.shape[-1]
    g4 = 4 * h_dim

    x = x_ref[...]
    whh = whh_ref[...]          # loop-invariant fused RHS, hoisted

    # --- One batched input-side projection for all timesteps (gates + skip in one MXU call) ---
    proj = jnp.dot(x, win_ref[...], preferred_element_type=jnp.float32) + bin_ref[...]
    xgates = proj[:, :g4]       # (N, 4H)  gate pre-activations, bias folded in
    skip = proj[:, g4:]         # (N, H)   skip connection term

    # --- Recurrence (fully unrolled; the only per-step MXU work is h @ Whh_all) ---
    h = h0_ref[...]             # (1, H)
    c = c0_ref[...]             # (1, H)
    outs = []
    for t in range(n):
        gates = xgates[t:t + 1, :] + jnp.dot(h, whh, preferred_element_type=jnp.float32)  # (1, 4H)
        s = jax.nn.sigmoid(gates)                        # one wide EUP push covers i, f, o
        i_g = s[:, 0 * h_dim:1 * h_dim]
        f_g = s[:, 1 * h_dim:2 * h_dim]
        o_g = s[:, 3 * h_dim:4 * h_dim]
        g_g = jnp.tanh(gates[:, 2 * h_dim:3 * h_dim])
        c = f_g * c + i_g * g_g
        h = o_g * jnp.tanh(c)
        outs.append(h)
    lstm_out = jnp.concatenate(outs, axis=0)             # (N, H), assembled in vregs, stored once

    # --- Skip connection + instance-space classifier (batched over all instances) ---
    reprs = lstm_out + skip
    hid = jnp.maximum(
        jnp.dot(reprs, w1_ref[...], preferred_element_type=jnp.float32) + b1_ref[...], 0.0)
    preds = jnp.dot(hid, w2_ref[...], preferred_element_type=jnp.float32) + b2_ref[...]

    pred_ref[...] = preds
    # agg_func = mean over the instance axis.
    bag_ref[...] = jnp.mean(preds, axis=0, keepdims=True)


def _full_spec(shape):
    nd = len(shape)
    return pl.BlockSpec(shape, lambda *_, nd=nd: (0,) * nd)


def pack_params(p):
    """One-time host/XLA-side packing: fuse gate matrices + skip projection along lanes."""
    w_in = jnp.concatenate([p["wih"][k] for k in range(4)] + [p["wskip"]], axis=-1)  # (d_in, 5H)
    b_in = jnp.concatenate([p["b"][k] for k in range(4)] + [p["bskip"]], axis=-1)    # (1,    5H)
    whh = jnp.concatenate([p["whh"][k] for k in range(4)], axis=-1)                  # (H,    4H)
    return dict(w_in=w_in, b_in=b_in, whh=whh, h0=p["h0"], c0=p["c0"],
                w1=p["w1"], b1=p["b1"], w2=p["w2"], b2=p["b2"])


@jax.jit
def lstm_asc_forward(x, packed):
    n, _ = x.shape
    n_classes = packed["b2"].shape[-1]

    args = (
        x,
        packed["w_in"], packed["b_in"], packed["whh"],
        packed["h0"], packed["c0"],
        packed["w1"], packed["b1"], packed["w2"], packed["b2"],
    )

    preds, bag = pl.pallas_call(
        _lstm_asc_kernel,
        out_shape=(
            jax.ShapeDtypeStruct((n, n_classes), jnp.float32),
            jax.ShapeDtypeStruct((1, n_classes), jnp.float32),
        ),
        grid=(1,),
        in_specs=[_full_spec(a.shape) for a in args],
        out_specs=[_full_spec((n, n_classes)), _full_spec((1, n_classes))],
        compiler_params=pltpu.CompilerParams(dimension_semantics=("arbitrary",)),
    )(*args)

    # torch.mean(instance_predictions.squeeze(), dim=0)
    bag_prediction = jnp.squeeze(bag)
    return bag_prediction, preds


def _reference(x, p):
    """Pure-JAX reference for correctness checking (per-gate, PyTorch semantics)."""
    n = x.shape[0]
    h, c = p["h0"], p["c0"]
    outs = []
    for t in range(n):
        x_t = x[t:t + 1]
        i = jax.nn.sigmoid(x_t @ p["wih"][0] + h @ p["whh"][0] + p["b"][0])
        f = jax.nn.sigmoid(x_t @ p["wih"][1] + h @ p["whh"][1] + p["b"][1])
        g = jnp.tanh(x_t @ p["wih"][2] + h @ p["whh"][2] + p["b"][2])
        o = jax.nn.sigmoid(x_t @ p["wih"][3] + h @ p["whh"][3] + p["b"][3])
        c = f * c + i * g
        h = o * jnp.tanh(c)
        outs.append(h)
    lstm_out = jnp.concatenate(outs, axis=0)
    reprs = lstm_out + (x @ p["wskip"] + p["bskip"])
    hid = jax.nn.relu(reprs @ p["w1"] + p["b1"])
    preds = hid @ p["w2"] + p["b2"]
    bag = jnp.mean(jnp.squeeze(preds), axis=0)
    return bag, preds


def make_params(key, d_in, d_hid, ds_hid, n_classes):
    ks = jax.random.split(key, 10)
    s_lstm = 1.0 / jnp.sqrt(d_hid)
    s_skip = 1.0 / jnp.sqrt(d_in)
    s_fc1 = 1.0 / jnp.sqrt(d_hid)
    s_fc2 = 1.0 / jnp.sqrt(ds_hid)
    u = lambda k, shape, s: jax.random.uniform(
        k, shape, dtype=jnp.float32, minval=-s, maxval=s)
    b_ih = u(ks[2], (4, 1, d_hid), s_lstm)
    b_hh = u(ks[3], (4, 1, d_hid), s_lstm)
    return dict(
        wih=u(ks[0], (4, d_in, d_hid), s_lstm),      # W_ih^T per gate (i, f, g, o)
        whh=u(ks[1], (4, d_hid, d_hid), s_lstm),     # W_hh^T per gate
        b=b_ih + b_hh,                               # combined LSTM bias per gate
        h0=jnp.zeros((1, d_hid), jnp.float32),       # init_hidden (module inits to zeros)
        c0=jnp.zeros((1, d_hid), jnp.float32),       # init_cell
        wskip=u(ks[4], (d_in, d_hid), s_skip),
        bskip=u(ks[5], (1, d_hid), s_skip),
        w1=u(ks[6], (d_hid, ds_hid), s_fc1),
        b1=u(ks[7], (1, ds_hid), s_fc1),
        w2=u(ks[8], (ds_hid, n_classes), s_fc2),
        b2=u(ks[9], (1, n_classes), s_fc2),
    )


if __name__ == "__main__":
    # Small config: d_in=16, d_hid=32, n_lstm_layers=1, ds_hid=(16,), n_classes=1, agg="mean".
    n_instances, d_in, d_hid, ds_hid, n_classes = 8, 16, 32, 16, 1

    key = jax.random.PRNGKey(0)
    k_x, k_p = jax.random.split(key)
    x = jax.random.normal(k_x, (n_instances, d_in), dtype=jnp.float32)
    params = make_params(k_p, d_in, d_hid, ds_hid, n_classes)
    packed = pack_params(params)

    bag_pred, inst_preds = lstm_asc_forward(x, packed)
    jax.block_until_ready((bag_pred, inst_preds))

    bag_ref, preds_ref = _reference(x, params)
    assert inst_preds.shape == (n_instances, n_classes)
    assert bag_pred.shape == ()
    assert jnp.allclose(inst_preds, preds_ref, atol=1e-5, rtol=1e-5)
    assert jnp.allclose(bag_pred, bag_ref, atol=1e-5, rtol=1e-5)

    print("KERNEL_OK")
</pallas_src>

<mosaic_0001>
module attributes {stable_mosaic.version = 11 : i64} {
  func.func @_lstm_asc_kernel(%arg0: i32, %arg1: memref<8x16xf32, #tpu.memory_space<vmem>>, %arg2: memref<16x160xf32, #tpu.memory_space<vmem>>, %arg3: memref<1x160xf32, #tpu.memory_space<vmem>>, %arg4: memref<32x128xf32, #tpu.memory_space<vmem>>, %arg5: memref<1x32xf32, #tpu.memory_space<vmem>>, %arg6: memref<1x32xf32, #tpu.memory_space<vmem>>, %arg7: memref<32x16xf32, #tpu.memory_space<vmem>>, %arg8: memref<1x16xf32, #tpu.memory_space<vmem>>, %arg9: memref<16x1xf32, #tpu.memory_space<vmem>>, %arg10: memref<1x1xf32, #tpu.memory_space<vmem>>, %arg11: memref<8x1xf32, #tpu.memory_space<vmem>>, %arg12: memref<1x1xf32, #tpu.memory_space<vmem>>) attributes {dimension_semantics = [#tpu.dimension_semantics<arbitrary>], iteration_bounds = array<i64: 1>, scalar_prefetch = 0 : i64, scratch_operands = 0 : i64, tpu.core_type = #tpu.core_type<tc>, window_params = [{pipeline_mode = #tpu.pipeline_mode<synchronous>, transform_indices = @transform_0, window_bounds = array<i64: 8, 16>}, {pipeline_mode = #tpu.pipeline_mode<synchronous>, transform_indices = @transform_1, window_bounds = array<i64: 16, 160>}, {pipeline_mode = #tpu.pipeline_mode<synchronous>, transform_indices = @transform_2, window_bounds = array<i64: 1, 160>}, {pipeline_mode = #tpu.pipeline_mode<synchronous>, transform_indices = @transform_3, window_bounds = array<i64: 32, 128>}, {pipeline_mode = #tpu.pipeline_mode<synchronous>, transform_indices = @transform_4, window_bounds = array<i64: 1, 32>}, {pipeline_mode = #tpu.pipeline_mode<synchronous>, transform_indices = @transform_5, window_bounds = array<i64: 1, 32>}, {pipeline_mode = #tpu.pipeline_mode<synchronous>, transform_indices = @transform_6, window_bounds = array<i64: 32, 16>}, {pipeline_mode = #tpu.pipeline_mode<synchronous>, transform_indices = @transform_7, window_bounds = array<i64: 1, 16>}, {pipeline_mode = #tpu.pipeline_mode<synchronous>, transform_indices = @transform_8, window_bounds = array<i64: 16, 1>}, {pipeline_mode = #tpu.pipeline_mode<synchronous>, transform_indices = @transform_9, window_bounds = array<i64: 1, 1>}, {pipeline_mode = #tpu.pipeline_mode<synchronous>, transform_indices = @transform_10, window_bounds = array<i64: 8, 1>}, {pipeline_mode = #tpu.pipeline_mode<synchronous>, transform_indices = @transform_11, window_bounds = array<i64: 1, 1>}]} {
    %c0 = arith.constant 0 : index
    %c0_0 = arith.constant 0 : index
    %0 = vector.load %arg1[%c0, %c0_0] : memref<8x16xf32, #tpu.memory_space<vmem>>, vector<8x16xf32>
    %c0_1 = arith.constant 0 : index
    %c0_2 = arith.constant 0 : index
    %1 = vector.load %arg4[%c0_1, %c0_2] : memref<32x128xf32, #tpu.memory_space<vmem>>, vector<32x128xf32>
    %c0_3 = arith.constant 0 : index
    %c0_4 = arith.constant 0 : index
    %2 = vector.load %arg2[%c0_3, %c0_4] : memref<16x160xf32, #tpu.memory_space<vmem>>, vector<16x160xf32>
    %cst = arith.constant dense<0.000000e+00> : vector<8x160xf32>
    %3 = tpu.matmul %0, %2, %cst {dimension_numbers = #tpu.dot_dimension_numbers<[1], [0], [0], [1], [0, 0, 1, 1], [], []>} : vector<8x16xf32>, vector<16x160xf32>, vector<8x160xf32> -> vector<8x160xf32>
    %c0_5 = arith.constant 0 : index
    %c0_6 = arith.constant 0 : index
    %4 = vector.load %arg3[%c0_5, %c0_6] : memref<1x160xf32, #tpu.memory_space<vmem>>, vector<1x160xf32>
    %5 = vector.broadcast %4 : vector<1x160xf32> to vector<8x160xf32>
    %6 = arith.addf %3, %5 : vector<8x160xf32>
    %7 = vector.extract_strided_slice %6 {offsets = [0, 0], sizes = [8, 128], strides = [1, 1]} : vector<8x160xf32> to vector<8x128xf32>
    %8 = vector.extract_strided_slice %6 {offsets = [0, 128], sizes = [8, 32], strides = [1, 1]} : vector<8x160xf32> to vector<8x32xf32>
    %c0_7 = arith.constant 0 : index
    %c0_8 = arith.constant 0 : index
    %9 = vector.load %arg5[%c0_7, %c0_8] : memref<1x32xf32, #tpu.memory_space<vmem>>, vector<1x32xf32>
    %c0_9 = arith.constant 0 : index
    %c0_10 = arith.constant 0 : index
    %10 = vector.load %arg6[%c0_9, %c0_10] : memref<1x32xf32, #tpu.memory_space<vmem>>, vector<1x32xf32>
    %11 = vector.extract_strided_slice %7 {offsets = [0, 0], sizes = [1, 128], strides = [1, 1]} : vector<8x128xf32> to vector<1x128xf32>
    %cst_11 = arith.constant dense<0.000000e+00> : vector<1x128xf32>
    %12 = tpu.matmul %9, %1, %cst_11 {dimension_numbers = #tpu.dot_dimension_numbers<[1], [0], [0], [1], [0, 0, 1, 1], [], []>} : vector<1x32xf32>, vector<32x128xf32>, vector<1x128xf32> -> vector<1x128xf32>
    %13 = arith.addf %11, %12 : vector<1x128xf32>
    %14 = arith.negf %13 : vector<1x128xf32>
    %15 = math.exp %14 : vector<1x128xf32>
    %cst_12 = arith.constant 1.000000e+00 : f32
    %16 = vector.broadcast %cst_12 : f32 to vector<1x128xf32>
    %17 = arith.addf %16, %15 : vector<1x128xf32>
    %18 = arith.divf %16, %17 : vector<1x128xf32>
    %19 = vector.extract_strided_slice %18 {offsets = [0, 0], sizes = [1, 32], strides = [1, 1]} : vector<1x128xf32> to vector<1x32xf32>
    %20 = vector.extract_strided_slice %18 {offsets = [0, 32], sizes = [1, 32], strides = [1, 1]} : vector<1x128xf32> to vector<1x32xf32>
    %21 = vector.extract_strided_slice %18 {offsets = [0, 96], sizes = [1, 32], strides = [1, 1]} : vector<1x128xf32> to vector<1x32xf32>
    %22 = vector.extract_strided_slice %13 {offsets = [0, 64], sizes = [1, 32], strides = [1, 1]} : vector<1x128xf32> to vector<1x32xf32>
    %23 = math.tanh %22 : vector<1x32xf32>
    %24 = arith.mulf %20, %10 : vector<1x32xf32>
    %25 = arith.mulf %19, %23 : vector<1x32xf32>
    %26 = arith.addf %24, %25 : vector<1x32xf32>
    %27 = math.tanh %26 : vector<1x32xf32>
    %28 = arith.mulf %21, %27 : vector<1x32xf32>
    %29 = vector.extract_strided_slice %7 {offsets = [1, 0], sizes = [1, 128], strides = [1, 1]} : vector<8x128xf32> to vector<1x128xf32>
    %cst_13 = arith.constant dense<0.000000e+00> : vector<1x128xf32>
    %30 = tpu.matmul %28, %1, %cst_13 {dimension_numbers = #tpu.dot_dimension_numbers<[1], [0], [0], [1], [0, 0, 1, 1], [], []>} : vector<1x32xf32>, vector<32x128xf32>, vector<1x128xf32> -> vector<1x128xf32>
    %31 = arith.addf %29, %30 : vector<1x128xf32>
    %32 = arith.negf %31 : vector<1x128xf32>
    %33 = math.exp %32 : vector<1x128xf32>
    %cst_14 = arith.constant 1.000000e+00 : f32
    %34 = vector.broadcast %cst_14 : f32 to vector<1x128xf32>
    %35 = arith.addf %34, %33 : vector<1x128xf32>
    %36 = arith.divf %34, %35 : vector<1x128xf32>
    %37 = vector.extract_strided_slice %36 {offsets = [0, 0], sizes = [1, 32], strides = [1, 1]} : vector<1x128xf32> to vector<1x32xf32>
    %38 = vector.extract_strided_slice %36 {offsets = [0, 32], sizes = [1, 32], strides = [1, 1]} : vector<1x128xf32> to vector<1x32xf32>
    %39 = vector.extract_strided_slice %36 {offsets = [0, 96], sizes = [1, 32], strides = [1, 1]} : vector<1x128xf32> to vector<1x32xf32>
    %40 = vector.extract_strided_slice %31 {offsets = [0, 64], sizes = [1, 32], strides = [1, 1]} : vector<1x128xf32> to vector<1x32xf32>
    %41 = math.tanh %40 : vector<1x32xf32>
    %42 = arith.mulf %38, %26 : vector<1x32xf32>
    %43 = arith.mulf %37, %41 : vector<1x32xf32>
    %44 = arith.addf %42, %43 : vector<1x32xf32>
    %45 = math.tanh %44 : vector<1x32xf32>
    %46 = arith.mulf %39, %45 : vector<1x32xf32>
    %47 = vector.extract_strided_slice %7 {offsets = [2, 0], sizes = [1, 128], strides = [1, 1]} : vector<8x128xf32> to vector<1x128xf32>
    %cst_15 = arith.constant dense<0.000000e+00> : vector<1x128xf32>
    %48 = tpu.matmul %46, %1, %cst_15 {dimension_numbers = #tpu.dot_dimension_numbers<[1], [0], [0], [1], [0, 0, 1, 1], [], []>} : vector<1x32xf32>, vector<32x128xf32>, vector<1x128xf32> -> vector<1x128xf32>
    %49 = arith.addf %47, %48 : vector<1x128xf32>
    %50 = arith.negf %49 : vector<1x128xf32>
    %51 = math.exp %50 : vector<1x128xf32>
    %cst_16 = arith.constant 1.000000e+00 : f32
    %52 = vector.broadcast %cst_16 : f32 to vector<1x128xf32>
    %53 = arith.addf %52, %51 : vector<1x128xf32>
    %54 = arith.divf %52, %53 : vector<1x128xf32>
    %55 = vector.extract_strided_slice %54 {offsets = [0, 0], sizes = [1, 32], strides = [1, 1]} : vector<1x128xf32> to vector<1x32xf32>
    %56 = vector.extract_strided_slice %54 {offsets = [0, 32], sizes = [1, 32], strides = [1, 1]} : vector<1x128xf32> to vector<1x32xf32>
    %57 = vector.extract_strided_slice %54 {offsets = [0, 96], sizes = [1, 32], strides = [1, 1]} : vector<1x128xf32> to vector<1x32xf32>
    %58 = vector.extract_strided_slice %49 {offsets = [0, 64], sizes = [1, 32], strides = [1, 1]} : vector<1x128xf32> to vector<1x32xf32>
    %59 = math.tanh %58 : vector<1x32xf32>
    %60 = arith.mulf %56, %44 : vector<1x32xf32>
    %61 = arith.mulf %55, %59 : vector<1x32xf32>
    %62 = arith.addf %60, %61 : vector<1x32xf32>
    %63 = math.tanh %62 : vector<1x32xf32>
    %64 = arith.mulf %57, %63 : vector<1x32xf32>
    %65 = vector.extract_strided_slice %7 {offsets = [3, 0], sizes = [1, 128], strides = [1, 1]} : vector<8x128xf32> to vector<1x128xf32>
    %cst_17 = arith.constant dense<0.000000e+00> : vector<1x128xf32>
    %66 = tpu.matmul %64, %1, %cst_17 {dimension_numbers = #tpu.dot_dimension_numbers<[1], [0], [0], [1], [0, 0, 1, 1], [], []>} : vector<1x32xf32>, vector<32x128xf32>, vector<1x128xf32> -> vector<1x128xf32>
    %67 = arith.addf %65, %66 : vector<1x128xf32>
    %68 = arith.negf %67 : vector<1x128xf32>
    %69 = math.exp %68 : vector<1x128xf32>
    %cst_18 = arith.constant 1.000000e+00 : f32
    %70 = vector.broadcast %cst_18 : f32 to vector<1x128xf32>
    %71 = arith.addf %70, %69 : vector<1x128xf32>
    %72 = arith.divf %70, %71 : vector<1x128xf32>
    %73 = vector.extract_strided_slice %72 {offsets = [0, 0], sizes = [1, 32], strides = [1, 1]} : vector<1x128xf32> to vector<1x32xf32>
    %74 = vector.extract_strided_slice %72 {offsets = [0, 32], sizes = [1, 32], strides = [1, 1]} : vector<1x128xf32> to vector<1x32xf32>
    %75 = vector.extract_strided_slice %72 {offsets = [0, 96], sizes = [1, 32], strides = [1, 1]} : vector<1x128xf32> to vector<1x32xf32>
    %76 = vector.extract_strided_slice %67 {offsets = [0, 64], sizes = [1, 32], strides = [1, 1]} : vector<1x128xf32> to vector<1x32xf32>
    %77 = math.tanh %76 : vector<1x32xf32>
    %78 = arith.mulf %74, %62 : vector<1x32xf32>
    %79 = arith.mulf %73, %77 : vector<1x32xf32>
    %80 = arith.addf %78, %79 : vector<1x32xf32>
    %81 = math.tanh %80 : vector<1x32xf32>
    %82 = arith.mulf %75, %81 : vector<1x32xf32>
    %83 = vector.extract_strided_slice %7 {offsets = [4, 0], sizes = [1, 128], strides = [1, 1]} : vector<8x128xf32> to vector<1x128xf32>
    %cst_19 = arith.constant dense<0.000000e+00> : vector<1x128xf32>
    %84 = tpu.matmul %82, %1, %cst_19 {dimension_numbers = #tpu.dot_dimension_numbers<[1], [0], [0], [1], [0, 0, 1, 1], [], []>} : vector<1x32xf32>, vector<32x128xf32>, vector<1x128xf32> -> vector<1x128xf32>
    %85 = arith.addf %83, %84 : vector<1x128xf32>
    %86 = arith.negf %85 : vector<1x128xf32>
    %87 = math.exp %86 : vector<1x128xf32>
    %cst_20 = arith.constant 1.000000e+00 : f32
    %88 = vector.broadcast %cst_20 : f32 to vector<1x128xf32>
    %89 = arith.addf %88, %87 : vector<1x128xf32>
    %90 = arith.divf %88, %89 : vector<1x128xf32>
    %91 = vector.extract_strided_slice %90 {offsets = [0, 0], sizes = [1, 32], strides = [1, 1]} : vector<1x128xf32> to vector<1x32xf32>
    %92 = vector.extract_strided_slice %90 {offsets = [0, 32], sizes = [1, 32], strides = [1, 1]} : vector<1x128xf32> to vector<1x32xf32>
    %93 = vector.extract_strided_slice %90 {offsets = [0, 96], sizes = [1, 32], strides = [1, 1]} : vector<1x128xf32> to vector<1x32xf32>
    %94 = vector.extract_strided_slice %85 {offsets = [0, 64], sizes = [1, 32], strides = [1, 1]} : vector<1x128xf32> to vector<1x32xf32>
    %95 = math.tanh %94 : vector<1x32xf32>
    %96 = arith.mulf %92, %80 : vector<1x32xf32>
    %97 = arith.mulf %91, %95 : vector<1x32xf32>
    %98 = arith.addf %96, %97 : vector<1x32xf32>
    %99 = math.tanh %98 : vector<1x32xf32>
    %100 = arith.mulf %93, %99 : vector<1x32xf32>
    %101 = vector.extract_strided_slice %7 {offsets = [5, 0], sizes = [1, 128], strides = [1, 1]} : vector<8x128xf32> to vector<1x128xf32>
    %cst_21 = arith.constant dense<0.000000e+00> : vector<1x128xf32>
    %102 = tpu.matmul %100, %1, %cst_21 {dimension_numbers = #tpu.dot_dimension_numbers<[1], [0], [0], [1], [0, 0, 1, 1], [], []>} : vector<1x32xf32>, vector<32x128xf32>, vector<1x128xf32> -> vector<1x128xf32>
    %103 = arith.addf %101, %102 : vector<1x128xf32>
    %104 = arith.negf %103 : vector<1x128xf32>
    %105 = math.exp %104 : vector<1x128xf32>
    %cst_22 = arith.constant 1.000000e+00 : f32
    %106 = vector.broadcast %cst_22 : f32 to vector<1x128xf32>
    %107 = arith.addf %106, %105 : vector<1x128xf32>
    %108 = arith.divf %106, %107 : vector<1x128xf32>
    %109 = vector.extract_strided_slice %108 {offsets = [0, 0], sizes = [1, 32], strides = [1, 1]} : vector<1x128xf32> to vector<1x32xf32>
    %110 = vector.extract_strided_slice %108 {offsets = [0, 32], sizes = [1, 32], strides = [1, 1]} : vector<1x128xf32> to vector<1x32xf32>
    %111 = vector.extract_strided_slice %108 {offsets = [0, 96], sizes = [1, 32], strides = [1, 1]} : vector<1x128xf32> to vector<1x32xf32>
    %112 = vector.extract_strided_slice %103 {offsets = [0, 64], sizes = [1, 32], strides = [1, 1]} : vector<1x128xf32> to vector<1x32xf32>
    %113 = math.tanh %112 : vector<1x32xf32>
    %114 = arith.mulf %110, %98 : vector<1x32xf32>
    %115 = arith.mulf %109, %113 : vector<1x32xf32>
    %116 = arith.addf %114, %115 : vector<1x32xf32>
    %117 = math.tanh %116 : vector<1x32xf32>
    %118 = arith.mulf %111, %117 : vector<1x32xf32>
    %119 = vector.extract_strided_slice %7 {offsets = [6, 0], sizes = [1, 128], strides = [1, 1]} : vector<8x128xf32> to vector<1x128xf32>
    %cst_23 = arith.constant dense<0.000000e+00> : vector<1x128xf32>
    %120 = tpu.matmul %118, %1, %cst_23 {dimension_numbers = #tpu.dot_dimension_numbers<[1], [0], [0], [1], [0, 0, 1, 1], [], []>} : vector<1x32xf32>, vector<32x128xf32>, vector<1x128xf32> -> vector<1x128xf32>
    %121 = arith.addf %119, %120 : vector<1x128xf32>
    %122 = arith.negf %121 : vector<1x128xf32>
    %123 = math.exp %122 : vector<1x128xf32>
    %cst_24 = arith.constant 1.000000e+00 : f32
    %124 = vector.broadcast %cst_24 : f32 to vector<1x128xf32>
    %125 = arith.addf %124, %123 : vector<1x128xf32>
    %126 = arith.divf %124, %125 : vector<1x128xf32>
    %127 = vector.extract_strided_slice %126 {offsets = [0, 0], sizes = [1, 32], strides = [1, 1]} : vector<1x128xf32> to vector<1x32xf32>
    %128 = vector.extract_strided_slice %126 {offsets = [0, 32], sizes = [1, 32], strides = [1, 1]} : vector<1x128xf32> to vector<1x32xf32>
    %129 = vector.extract_strided_slice %126 {offsets = [0, 96], sizes = [1, 32], strides = [1, 1]} : vector<1x128xf32> to vector<1x32xf32>
    %130 = vector.extract_strided_slice %121 {offsets = [0, 64], sizes = [1, 32], strides = [1, 1]} : vector<1x128xf32> to vector<1x32xf32>
    %131 = math.tanh %130 : vector<1x32xf32>
    %132 = arith.mulf %128, %116 : vector<1x32xf32>
    %133 = arith.mulf %127, %131 : vector<1x32xf32>
    %134 = arith.addf %132, %133 : vector<1x32xf32>
    %135 = math.tanh %134 : vector<1x32xf32>
    %136 = arith.mulf %129, %135 : vector<1x32xf32>
    %137 = vector.extract_strided_slice %7 {offsets = [7, 0], sizes = [1, 128], strides = [1, 1]} : vector<8x128xf32> to vector<1x128xf32>
    %cst_25 = arith.constant dense<0.000000e+00> : vector<1x128xf32>
    %138 = tpu.matmul %136, %1, %cst_25 {dimension_numbers = #tpu.dot_dimension_numbers<[1], [0], [0], [1], [0, 0, 1, 1], [], []>} : vector<1x32xf32>, vector<32x128xf32>, vector<1x128xf32> -> vector<1x128xf32>
    %139 = arith.addf %137, %138 : vector<1x128xf32>
    %140 = arith.negf %139 : vector<1x128xf32>
    %141 = math.exp %140 : vector<1x128xf32>
    %cst_26 = arith.constant 1.000000e+00 : f32
    %142 = vector.broadcast %cst_26 : f32 to vector<1x128xf32>
    %143 = arith.addf %142, %141 : vector<1x128xf32>
    %144 = arith.divf %142, %143 : vector<1x128xf32>
    %145 = vector.extract_strided_slice %144 {offsets = [0, 0], sizes = [1, 32], strides = [1, 1]} : vector<1x128xf32> to vector<1x32xf32>
    %146 = vector.extract_strided_slice %144 {offsets = [0, 32], sizes = [1, 32], strides = [1, 1]} : vector<1x128xf32> to vector<1x32xf32>
    %147 = vector.extract_strided_slice %144 {offsets = [0, 96], sizes = [1, 32], strides = [1, 1]} : vector<1x128xf32> to vector<1x32xf32>
    %148 = vector.extract_strided_slice %139 {offsets = [0, 64], sizes = [1, 32], strides = [1, 1]} : vector<1x128xf32> to vector<1x32xf32>
    %149 = math.tanh %148 : vector<1x32xf32>
    %150 = arith.mulf %146, %134 : vector<1x32xf32>
    %151 = arith.mulf %145, %149 : vector<1x32xf32>
    %152 = arith.addf %150, %151 : vector<1x32xf32>
    %153 = math.tanh %152 : vector<1x32xf32>
    %154 = arith.mulf %147, %153 : vector<1x32xf32>
    %155 = tpu.concatenate %28, %46, %64, %82, %100, %118, %136, %154 in 0 : vector<1x32xf32>, vector<1x32xf32>, vector<1x32xf32>, vector<1x32xf32>, vector<1x32xf32>, vector<1x32xf32>, vector<1x32xf32>, vector<1x32xf32> -> vector<8x32xf32>
    %156 = arith.addf %155, %8 : vector<8x32xf32>
    %c0_27 = arith.constant 0 : index
    %c0_28 = arith.constant 0 : index
    %157 = vector.load %arg7[%c0_27, %c0_28] : memref<32x16xf32, #tpu.memory_space<vmem>>, vector<32x16xf32>
    %cst_29 = arith.constant dense<0.000000e+00> : vector<8x16xf32>
    %158 = tpu.matmul %156, %157, %cst_29 {dimension_numbers = #tpu.dot_dimension_numbers<[1], [0], [0], [1], [0, 0, 1, 1], [], []>} : vector<8x32xf32>, vector<32x16xf32>, vector<8x16xf32> -> vector<8x16xf32>
    %c0_30 = arith.constant 0 : index
    %c0_31 = arith.constant 0 : index
    %159 = vector.load %arg8[%c0_30, %c0_31] : memref<1x16xf32, #tpu.memory_space<vmem>>, vector<1x16xf32>
    %160 = vector.broadcast %159 : vector<1x16xf32> to vector<8x16xf32>
    %161 = arith.addf %158, %160 : vector<8x16xf32>
    %cst_32 = arith.constant 0.000000e+00 : f32
    %162 = vector.broadcast %cst_32 : f32 to vector<8x16xf32>
    %163 = arith.maximumf %161, %162 : vector<8x16xf32>
    %c0_33 = arith.constant 0 : index
    %c0_34 = arith.constant 0 : index
    %164 = vector.load %arg9[%c0_33, %c0_34] : memref<16x1xf32, #tpu.memory_space<vmem>>, vector<16x1xf32>
    %cst_35 = arith.constant dense<0.000000e+00> : vector<8x1xf32>
    %165 = tpu.matmul %163, %164, %cst_35 {dimension_numbers = #tpu.dot_dimension_numbers<[1], [0], [0], [1], [0, 0, 1, 1], [], []>} : vector<8x16xf32>, vector<16x1xf32>, vector<8x1xf32> -> vector<8x1xf32>
    %c0_36 = arith.constant 0 : index
    %c0_37 = arith.constant 0 : index
    %166 = vector.load %arg10[%c0_36, %c0_37] : memref<1x1xf32, #tpu.memory_space<vmem>>, vector<1x1xf32>
    %167 = vector.broadcast %166 : vector<1x1xf32> to vector<8x1xf32>
    %168 = arith.addf %165, %167 : vector<8x1xf32>
    %c0_38 = arith.constant 0 : index
    %c0_39 = arith.constant 0 : index
    %169 = vector.load %arg11[%c0_38, %c0_39] : memref<8x1xf32, #tpu.memory_space<vmem>>, vector<8x1xf32>
    tpu.vector_store %arg11[%c0_38, %c0_39], %168 {strides = array<i32>} : memref<8x1xf32, #tpu.memory_space<vmem>>, vector<8x1xf32>,
    %cst_40 = arith.constant dense<0.000000e+00> : vector<1xf32>
    %170 = vector.multi_reduction <add>, %168, %cst_40 [0] : vector<8x1xf32> to vector<1xf32>
    %171 = vector.shape_cast %170 : vector<1xf32> to vector<1x1xf32>
    %cst_41 = arith.constant 8.000000e+00 : f32
    %172 = vector.broadcast %cst_41 : f32 to vector<1x1xf32>
    %173 = arith.divf %171, %172 : vector<1x1xf32>
    %c0_42 = arith.constant 0 : index
    %c0_43 = arith.constant 0 : index
    %174 = vector.load %arg12[%c0_42, %c0_43] : memref<1x1xf32, #tpu.memory_space<vmem>>, vector<1x1xf32>
    tpu.vector_store %arg12[%c0_42, %c0_43], %173 {strides = array<i32>} : memref<1x1xf32, #tpu.memory_space<vmem>>, vector<1x1xf32>,
    return
  }
  func.func @transform_0(%arg0: i32) -> (i32, i32) {
    %c0_i32 = arith.constant 0 : i32
    %c0_i32_0 = arith.constant 0 : i32
    %c0_i32_1 = arith.constant 0 : i32
    return %c0_i32, %c0_i32_0 : i32, i32
  }
  func.func @transform_1(%arg0: i32) -> (i32, i32) {
    %c0_i32 = arith.constant 0 : i32
    %c0_i32_0 = arith.constant 0 : i32
    %c0_i32_1 = arith.constant 0 : i32
    return %c0_i32, %c0_i32_0 : i32, i32
  }
  func.func @transform_2(%arg0: i32) -> (i32, i32) {
    %c0_i32 = arith.constant 0 : i32
    %c0_i32_0 = arith.constant 0 : i32
    %c0_i32_1 = arith.constant 0 : i32
    return %c0_i32, %c0_i32_0 : i32, i32
  }
  func.func @transform_3(%arg0: i32) -> (i32, i32) {
    %c0_i32 = arith.constant 0 : i32
    %c0_i32_0 = arith.constant 0 : i32
    %c0_i32_1 = arith.constant 0 : i32
    return %c0_i32, %c0_i32_0 : i32, i32
  }
  func.func @transform_4(%arg0: i32) -> (i32, i32) {
    %c0_i32 = arith.constant 0 : i32
    %c0_i32_0 = arith.constant 0 : i32
    %c0_i32_1 = arith.constant 0 : i32
    return %c0_i32, %c0_i32_0 : i32, i32
  }
  func.func @transform_5(%arg0: i32) -> (i32, i32) {
    %c0_i32 = arith.constant 0 : i32
    %c0_i32_0 = arith.constant 0 : i32
    %c0_i32_1 = arith.constant 0 : i32
    return %c0_i32, %c0_i32_0 : i32, i32
  }
  func.func @transform_6(%arg0: i32) -> (i32, i32) {
    %c0_i32 = arith.constant 0 : i32
    %c0_i32_0 = arith.constant 0 : i32
    %c0_i32_1 = arith.constant 0 : i32
    return %c0_i32, %c0_i32_0 : i32, i32
  }
  func.func @transform_7(%arg0: i32) -> (i32, i32) {
    %c0_i32 = arith.constant 0 : i32
    %c0_i32_0 = arith.constant 0 : i32
    %c0_i32_1 = arith.constant 0 : i32
    return %c0_i32, %c0_i32_0 : i32, i32
  }
  func.func @transform_8(%arg0: i32) -> (i32, i32) {
    %c0_i32 = arith.constant 0 : i32
    %c0_i32_0 = arith.constant 0 : i32
    %c0_i32_1 = arith.constant 0 : i32
    return %c0_i32, %c0_i32_0 : i32, i32
  }
  func.func @transform_9(%arg0: i32) -> (i32, i32) {
    %c0_i32 = arith.constant 0 : i32
    %c0_i32_0 = arith.constant 0 : i32
    %c0_i32_1 = arith.constant 0 : i32
    return %c0_i32, %c0_i32_0 : i32, i32
  }
  func.func @transform_10(%arg0: i32) -> (i32, i32) {
    %c0_i32 = arith.constant 0 : i32
    %c0_i32_0 = arith.constant 0 : i32
    %c0_i32_1 = arith.constant 0 : i32
    return %c0_i32, %c0_i32_0 : i32, i32
  }
  func.func @transform_11(%arg0: i32) -> (i32, i32) {
    %c0_i32 = arith.constant 0 : i32
    %c0_i32_0 = arith.constant 0 : i32
    %c0_i32_1 = arith.constant 0 : i32
    return %c0_i32, %c0_i32_0 : i32, i32
  }
}

</mosaic_0001>

<llo_original>
// kernel: lstm_asc_forward.1
$region0: #{lstm_asc_forward.1}
  #allocation0 [shape = 'u32[]', space=smem, size = 0x4, offset = 0x4, fixed_abs, tag = 'smem constant byte address 0x4 - core index']
  #allocation1 [shape = 'u32[144,128]{1,0:T(1,128)}', space=vmem, size = 0x12000, scoped, tag = 'internal scratch']
  #allocation2 [shape = 'f32[1,1]{1,0:T(1,128)S(1)}', space=vmem, size = 0x200, scoped, tag = 'scoped memory for lstm_asc_forward.1']
  %s0 = inlined_call_operand.hbm [shape: f32[8,16], index: 0, kind: input, shape index: {}]
  %s1 = inlined_call_operand.vmem [shape: f32[16,160], index: 1, kind: input, shape index: {}]
  %s2 = inlined_call_operand.vmem [shape: f32[1,160], index: 2, kind: input, shape index: {}]
  %s3 = inlined_call_operand.vmem [shape: f32[32,128], index: 3, kind: input, shape index: {}]
  %s4 = inlined_call_operand.vmem [shape: f32[1,32], index: 4, kind: input, shape index: {}]
  %s5 = inlined_call_operand.vmem [shape: f32[1,32], index: 5, kind: input, shape index: {}]
  %s6 = inlined_call_operand.vmem [shape: f32[32,16], index: 6, kind: input, shape index: {}]
  %s7 = inlined_call_operand.hbm [shape: f32[1,16], index: 7, kind: input, shape index: {}]
  %s8 = inlined_call_operand.vmem [shape: f32[16,1], index: 8, kind: input, shape index: {}]
  %s9 = inlined_call_operand.<no memory space> [shape: f32[1,1], index: 9, kind: input, shape index: {}]
  %s10 = inlined_call_operand.vmem [shape: f32[8,1], index: 10, kind: output, shape index: {0}]
  %s11 = inlined_call_operand.hbm [shape: f32[1,1], index: 11, kind: output, shape index: {1}]
  %12 = xla_tuple %s10, %s11
  %s13 = sld [smem:[#allocation0]]
  $region66: #{lstm_asc_forward.1} parent=0
    _
  %s15 = ssub.s32 1, %s13
  %s16 = scalar_select 0, %s15, %s13
  %v17 = vstv %s9
  %18 = vst [vmem:[#allocation2] sm:$0x1] %v17
  $region1: #{lstm_asc_forward.1} parent=0
    #allocation3 [shape = 'u8[4096]{0}', space=vmem, size = 0x1000, scoped, tag = 'input window, operand 0, single buffered']
    #allocation4 [shape = 's32[1]{0}', space=sflag, size = 0x4, scoped, tag = 'scoped memory for lstm_asc_forward.1']
    #allocation5 [shape = 's32[1]{0}', space=sflag, size = 0x4, scoped, tag = 'scoped memory for lstm_asc_forward.1']
    #allocation6 [shape = 'u8[512]{0}', space=vmem, size = 0x400, scoped, tag = 'input window, operand 7, single buffered']
    #allocation7 [shape = 's32[1]{0}', space=sflag, size = 0x4, scoped, tag = 'scoped memory for lstm_asc_forward.1']
    #allocation8 [shape = 'u8[512]{0}', space=vmem, size = 0x400, scoped, tag = 'output window, operand 1, single buffered']
    %19 = vsyncpa [#allocation4], 0
    %20 = vsyncpa [#allocation7], 0
    %21 = vsyncpa [#allocation5], 0
    // Predicated region
    $region2: #{lstm_asc_forward.1} parent=1 // pred_check
      _
    $region3: #{lstm_asc_forward.1} parent=1 // pred_check_branch
      %23 = sbr.rel (0) target = $region5
    $region4: #{lstm_asc_forward.1} parent=1 // pred_region
      %s25 = ssub.s32 128, 128
      %26 = vsyncadd [#allocation4], %s25
      %s28 = sshll.u32 [#allocation3], 4
      %s29 = int_to_ptr.vmem [resolvable:$true] %s28
      %31 = dma.hbm_to_vmem [thread:$0]  %s0, 128, %s29, [#allocation4]
    $region5: #{lstm_asc_forward.1} parent=1 // pred_fallthru
      _
    // Predicated region
    $region6: #{lstm_asc_forward.1} parent=1 // pred_check
      _
    $region7: #{lstm_asc_forward.1} parent=1 // pred_check_branch
      %33 = sbr.rel (0) target = $region9
    $region8: #{lstm_asc_forward.1} parent=1 // pred_region
      _
    $region9: #{lstm_asc_forward.1} parent=1 // pred_fallthru
      _
    // Predicated region
    $region10: #{lstm_asc_forward.1} parent=1 // pred_check
      _
    $region11: #{lstm_asc_forward.1} parent=1 // pred_check_branch
      %35 = sbr.rel (0) target = $region13
    $region12: #{lstm_asc_forward.1} parent=1 // pred_region
      _
    $region13: #{lstm_asc_forward.1} parent=1 // pred_fallthru
      _
    // Predicated region
    $region14: #{lstm_asc_forward.1} parent=1 // pred_check
      _
    $region15: #{lstm_asc_forward.1} parent=1 // pred_check_branch
      %37 = sbr.rel (0) target = $region17
    $region16: #{lstm_asc_forward.1} parent=1 // pred_region
      _
    $region17: #{lstm_asc_forward.1} parent=1 // pred_fallthru
      _
    // Predicated region
    $region18: #{lstm_asc_forward.1} parent=1 // pred_check
      _
    $region19: #{lstm_asc_forward.1} parent=1 // pred_check_branch
      %39 = sbr.rel (0) target = $region21
    $region20: #{lstm_asc_forward.1} parent=1 // pred_region
      _
    $region21: #{lstm_asc_forward.1} parent=1 // pred_fallthru
      _
    // Predicated region
    $region22: #{lstm_asc_forward.1} parent=1 // pred_check
      _
    $region23: #{lstm_asc_forward.1} parent=1 // pred_check_branch
      %41 = sbr.rel (0) target = $region25
    $region24: #{lstm_asc_forward.1} parent=1 // pred_region
      _
    $region25: #{lstm_asc_forward.1} parent=1 // pred_fallthru
      _
    // Predicated region
    $region26: #{lstm_asc_forward.1} parent=1 // pred_check
      _
    $region27: #{lstm_asc_forward.1} parent=1 // pred_check_branch
      %43 = sbr.rel (0) target = $region29
    $region28: #{lstm_asc_forward.1} parent=1 // pred_region
      _
    $region29: #{lstm_asc_forward.1} parent=1 // pred_fallthru
      _
    // Predicated region
    $region30: #{lstm_asc_forward.1} parent=1 // pred_check
      _
    $region31: #{lstm_asc_forward.1} parent=1 // pred_check_branch
      %45 = sbr.rel (0) target = $region33
    $region32: #{lstm_asc_forward.1} parent=1 // pred_region
      %s47 = ssub.s32 16, 16
      %48 = vsyncadd [#allocation7], %s47
      %s50 = sshll.u32 [#allocation6], 4
      %s51 = int_to_ptr.vmem [resolvable:$true] %s50
      %53 = dma.hbm_to_vmem [thread:$0]  %s7, 16, %s51, [#allocation7]
    $region33: #{lstm_asc_forward.1} parent=1 // pred_fallthru
      _
    // Predicated region
    $region34: #{lstm_asc_forward.1} parent=1 // pred_check
      _
    $region35: #{lstm_asc_forward.1} parent=1 // pred_check_branch
      %55 = sbr.rel (0) target = $region37
    $region36: #{lstm_asc_forward.1} parent=1 // pred_region
      _
    $region37: #{lstm_asc_forward.1} parent=1 // pred_fallthru
      _
    // Predicated region
    $region38: #{lstm_asc_forward.1} parent=1 // pred_check
      _
    $region39: #{lstm_asc_forward.1} parent=1 // pred_check_branch
      %57 = sbr.rel (0) target = $region41
    $region40: #{lstm_asc_forward.1} parent=1 // pred_region
      _
    $region41: #{lstm_asc_forward.1} parent=1 // pred_fallthru
      _
    // Predicated region
    $region42: #{lstm_asc_forward.1} parent=1 // pred_check
      _
    $region43: #{lstm_asc_forward.1} parent=1 // pred_check_branch
      %59 = sbr.rel (0) target = $region45
    $region44: #{lstm_asc_forward.1} parent=1 // pred_region
      %60 = dma.done [#allocation4], 128
    $region45: #{lstm_asc_forward.1} parent=1 // pred_fallthru
      _
    // Predicated region
    $region46: #{lstm_asc_forward.1} parent=1 // pred_check
      _
    $region47: #{lstm_asc_forward.1} parent=1 // pred_check_branch
      %62 = sbr.rel (0) target = $region49
    $region48: #{lstm_asc_forward.1} parent=1 // pred_region
      %63 = dma.done [#allocation7], 16
    $region49: #{lstm_asc_forward.1} parent=1 // pred_fallthru
      _
    %v64 = vld [vmem:[#allocation3] sm:$0xff]
    %v65 = vld [vmem:[%s3] sm:$0xff]
    %v66 = vld [vmem:[%s3 + $0x8] sm:$0xff]
    %v67 = vld [vmem:[%s3 + $0x10] sm:$0xff]
    %v68 = vld [vmem:[%s3 + $0x18] sm:$0xff]
    %v69 = vld [vmem:[%s1] sm:$0xff]
    %v70 = vld [vmem:[%s1 + $0x8] sm:$0xff]
    %v71 = vld [vmem:[%s1 + $0x10] sm:$0xff]
    %v72 = vld [vmem:[%s1 + $0x18] sm:$0xff]
    %v73 = vld [vmem:[%s2] sm:$0x3]
    %v75 = vlaneseq
    %v76 = vshrl.u32 %v75, 7
    %v77 = vsub.s32 0, %v76
    %v78 = vrot.slane %v73, %v77
    %v79 = vlaneseq
    %v80 = vshrl.u32 %v79, 7
    %v81 = vsub.s32 1, %v80
    %v82 = vrot.slane %v73, %v81
    %vm85 = vcmask 130048
    %v87 = vsel %vm85, %v64, 0
    %89 = vmatprep.subr.mxu0 0.0
    %90 = vmatpush1.msra.mxu0 0.0
    %91 = vmatprep.subr.mxu0 0.0
    %92 = vmatpush1.msra.mxu0 0.0
    %93 = vmatprep.subr.mxu0 0.0
    %94 = vmatpush1.msra.mxu0 0.0
    %95 = vmatprep.subr.mxu0 0.0
    %96 = vmatpush1.msra.mxu0 0.0
    %97 = vmatprep.subr.mxu0 0.0
    %98 = vmatpush1.msra.mxu0 0.0
    %99 = vmatprep.subr.mxu0 0.0
    %100 = vmatpush1.msra.mxu0 0.0
    %101 = vmatprep.subr.mxu0 0.0
    %102 = vmatpush1.msra.mxu0 0.0
    %103 = vmatprep.subr.mxu0 0.0
    %104 = vmatpush1.msra.mxu0 0.0
    %105 = vmatprep.subr.mxu0 0.0
    %106 = vmatpush1.msra.mxu0 0.0
    %107 = vmatprep.subr.mxu0 0.0
    %108 = vmatpush1.msra.mxu0 0.0
    %109 = vmatprep.subr.mxu0 0.0
    %110 = vmatpush1.msra.mxu0 0.0
    %111 = vmatprep.subr.mxu0 0.0
    %112 = vmatpush1.msra.mxu0 0.0
    %113 = vmatprep.subr.mxu0 0.0
    %114 = vmatpush1.msra.mxu0 0.0
    %115 = vmatprep.subr.mxu0 0.0
    %116 = vmatpush1.msra.mxu0 0.0
    %117 = vmatprep.subr.mxu0 %v72
    %118 = vmatpush1.msra.mxu0 %v71
    %119 = vmatprep.subr.mxu0 %v70
    %120 = vmatpush1.msra.mxu0 %v69
    %121 = vmatprep.subr.mxu0 0.0
    %122 = vmatpush2.msra.mxu0 0.0
    %123 = vmatprep.subr.mxu0 0.0
    %124 = vmatpush2.msra.mxu0 0.0
    %125 = vmatprep.subr.mxu0 0.0
    %126 = vmatpush2.msra.mxu0 0.0
    %127 = vmatprep.subr.mxu0 0.0
    %128 = vmatpush2.msra.mxu0 0.0
    %129 = vmatprep.subr.mxu0 0.0
    %130 = vmatpush2.msra.mxu0 0.0
    %131 = vmatprep.subr.mxu0 0.0
    %132 = vmatpush2.msra.mxu0 0.0
    %133 = vmatprep.subr.mxu0 0.0
    %134 = vmatpush2.msra.mxu0 0.0
    %135 = vmatprep.subr.mxu0 0.0
    %136 = vmatpush2.msra.mxu0 0.0
    %137 = vmatprep.subr.mxu0 0.0
    %138 = vmatpush2.msra.mxu0 0.0
    %139 = vmatprep.subr.mxu0 0.0
    %140 = vmatpush2.msra.mxu0 0.0
    %141 = vmatprep.subr.mxu0 0.0
    %142 = vmatpush2.msra.mxu0 0.0
    %143 = vmatprep.subr.mxu0 0.0
    %144 = vmatpush2.msra.mxu0 0.0
    %145 = vmatprep.subr.mxu0 0.0
    %146 = vmatpush2.msra.mxu0 0.0
    %147 = vmatprep.subr.mxu0 0.0
    %148 = vmatpush2.msra.mxu0 0.0
    %149 = vmatprep.subr.mxu0 0.0
    %150 = vmatpush2.msra.mxu0 0.0
    %151 = vmatprep.subr.mxu0 0.0
    %152 = vmatpush2.msra.mxu0 0.0
    %153 = vmatprep.mubr.f32.mxu0 0.0
    %154 = vmatmul.mubr.f32.gmra.mxu0 %v87
    %v155 = vpop.f32.mrf.mxu0
    %v156 = vadd.f32 %v78, %v155
    %v157 = vpop.f32.mrf.mxu0
    %v158 = vadd.f32 %v82, %v157
    %159 = vdwg.mxu0
    %v160 = vld [vmem:[%s4] sm:$0x1]
    %v161 = vld [vmem:[%s5] sm:$0x1]
    %vm162 = vcmask 261120
    %v164 = vsel %vm162, %v160, 0
    %166 = vmatprep.subr.mxu0 0.0
    %167 = vmatpush1.msra.mxu0 0.0
    %168 = vmatprep.subr.mxu0 0.0
    %169 = vmatpush1.msra.mxu0 0.0
    %170 = vmatprep.subr.mxu0 0.0
    %171 = vmatpush1.msra.mxu0 0.0
    %172 = vmatprep.subr.mxu0 0.0
    %173 = vmatpush1.msra.mxu0 0.0
    %174 = vmatprep.subr.mxu0 0.0
    %175 = vmatpush1.msra.mxu0 0.0
    %176 = vmatprep.subr.mxu0 0.0
    %177 = vmatpush1.msra.mxu0 0.0
    %178 = vmatprep.subr.mxu0 0.0
    %179 = vmatpush1.msra.mxu0 0.0
    %180 = vmatprep.subr.mxu0 0.0
    %181 = vmatpush1.msra.mxu0 0.0
    %182 = vmatprep.subr.mxu0 0.0
    %183 = vmatpush1.msra.mxu0 0.0
    %184 = vmatprep.subr.mxu0 0.0
    %185 = vmatpush1.msra.mxu0 0.0
    %186 = vmatprep.subr.mxu0 0.0
    %187 = vmatpush1.msra.mxu0 0.0
    %188 = vmatprep.subr.mxu0 0.0
    %189 = vmatpush1.msra.mxu0 0.0
    %190 = vmatprep.subr.mxu0 0.0
    %191 = vmatpush1.msra.mxu0 %v68
    %192 = vmatprep.subr.mxu0 0.0
    %193 = vmatpush1.msra.mxu0 %v67
    %194 = vmatprep.subr.mxu0 0.0
    %195 = vmatpush1.msra.mxu0 %v66
    %196 = vmatprep.subr.mxu0 0.0
    %197 = vmatpush1.msra.mxu0 %v65
    %198 = vmatprep.subr.mxu0 0.0
    %199 = vmatpush2.msra.mxu0 0.0
    %200 = vmatprep.subr.mxu0 0.0
    %201 = vmatpush2.msra.mxu0 0.0
    %202 = vmatprep.subr.mxu0 0.0
    %203 = vmatpush2.msra.mxu0 0.0
    %204 = vmatprep.subr.mxu0 0.0
    %205 = vmatpush2.msra.mxu0 0.0
    %206 = vmatprep.subr.mxu0 0.0
    %207 = vmatpush2.msra.mxu0 0.0
    %208 = vmatprep.subr.mxu0 0.0
    %209 = vmatpush2.msra.mxu0 0.0
    %210 = vmatprep.subr.mxu0 0.0
    %211 = vmatpush2.msra.mxu0 0.0
    %212 = vmatprep.subr.mxu0 0.0
    %213 = vmatpush2.msra.mxu0 0.0
    %214 = vmatprep.subr.mxu0 0.0
    %215 = vmatpush2.msra.mxu0 0.0
    %216 = vmatprep.subr.mxu0 0.0
    %217 = vmatpush2.msra.mxu0 0.0
    %218 = vmatprep.subr.mxu0 0.0
    %219 = vmatpush2.msra.mxu0 0.0
    %220 = vmatprep.subr.mxu0 0.0
    %221 = vmatpush2.msra.mxu0 0.0
    %222 = vmatprep.subr.mxu0 0.0
    %223 = vmatpush2.msra.mxu0 0.0
    %224 = vmatprep.subr.mxu0 0.0
    %225 = vmatpush2.msra.mxu0 0.0
    %226 = vmatprep.subr.mxu0 0.0
    %227 = vmatpush2.msra.mxu0 0.0
    %228 = vmatprep.subr.mxu0 0.0
    %229 = vmatpush2.msra.mxu0 0.0
    %230 = vmatprep.mubr.f32.mxu0 0.0
    %231 = vmatmul.mubr.f32.gmra.mxu0 %v164
    %v232 = vpop.f32.mrf.mxu0
    %v233 = vadd.f32 0.0, %v232
    %v234 = vpop.f32.mrf.mxu0
    %235 = vdwg.mxu0
    %v236 = vadd.f32 %v156, %v233
    %v237 = vxor.u32 %v236, 2147483648
    %v238 = vmul.f32 %v237, 1.442695
    %v239 = vpow.pop %v238
    %v240 = vadd.f32 %v239, 1.0
    %v241 = vrcp.pop %v240
    %v242 = vmul.f32 1.0, %v241
    %v243 = vtanh.pop %v236
    %v245 = vlaneseq
    %v246 = vshrl.u32 %v245, 7
    %v247 = vsub.s32 0, %v246
    %v248 = vrot.slane %v161, %v247
    %249 = vrot.lane.b32.xlu0 %v248, 32
    %v250 = vpop.permute.xlu0 %249
    %v252 = vmul.f32 %v242, %v250
    %254 = vrot.lane.b32.xlu0 %v243, 64
    %v255 = vpop.permute.xlu0 %254
    %v257 = vmul.f32 %v242, %v255
    %259 = vrot.lane.b32.xlu0 %v257, 32
    %v260 = vpop.permute.xlu0 %259
    %v262 = vadd.f32 %v252, %v260
    %v263 = vtanh.pop %v262
    %265 = vrot.lane.b32.xlu0 %v263, 64
    %v266 = vpop.permute.xlu0 %265
    %v268 = vmul.f32 %v242, %v266
    %270 = vrot.lane.b32.xlu0 %v268, 32
    %v271 = vpop.permute.xlu0 %270
    %v272 = vsel %vm162, %v271, 0
    %274 = vmatprep.subr.mxu0 0.0
    %275 = vmatpush1.msra.mxu0 0.0
    %276 = vmatprep.subr.mxu0 0.0
    %277 = vmatpush1.msra.mxu0 0.0
    %278 = vmatprep.subr.mxu0 0.0
    %279 = vmatpush1.msra.mxu0 0.0
    %280 = vmatprep.subr.mxu0 0.0
    %281 = vmatpush1.msra.mxu0 0.0
    %282 = vmatprep.subr.mxu0 0.0
    %283 = vmatpush1.msra.mxu0 0.0
    %284 = vmatprep.subr.mxu0 0.0
    %285 = vmatpush1.msra.mxu0 0.0
    %286 = vmatprep.subr.mxu0 0.0
    %287 = vmatpush1.msra.mxu0 0.0
    %288 = vmatprep.subr.mxu0 0.0
    %289 = vmatpush1.msra.mxu0 0.0
    %290 = vmatprep.subr.mxu0 0.0
    %291 = vmatpush1.msra.mxu0 0.0
    %292 = vmatprep.subr.mxu0 0.0
    %293 = vmatpush1.msra.mxu0 0.0
    %294 = vmatprep.subr.mxu0 0.0
    %295 = vmatpush1.msra.mxu0 0.0
    %296 = vmatprep.subr.mxu0 0.0
    %297 = vmatpush1.msra.mxu0 0.0
    %298 = vmatprep.subr.mxu0 0.0
    %299 = vmatpush1.msra.mxu0 %v68
    %300 = vmatprep.subr.mxu0 0.0
    %301 = vmatpush1.msra.mxu0 %v67
    %302 = vmatprep.subr.mxu0 0.0
    %303 = vmatpush1.msra.mxu0 %v66
    %304 = vmatprep.subr.mxu0 0.0
    %305 = vmatpush1.msra.mxu0 %v65
    %306 = vmatprep.subr.mxu0 0.0
    %307 = vmatpush2.msra.mxu0 0.0
    %308 = vmatprep.subr.mxu0 0.0
    %309 = vmatpush2.msra.mxu0 0.0
    %310 = vmatprep.subr.mxu0 0.0
    %311 = vmatpush2.msra.mxu0 0.0
    %312 = vmatprep.subr.mxu0 0.0
    %313 = vmatpush2.msra.mxu0 0.0
    %314 = vmatprep.subr.mxu0 0.0
    %315 = vmatpush2.msra.mxu0 0.0
    %316 = vmatprep.subr.mxu0 0.0
    %317 = vmatpush2.msra.mxu0 0.0
    %318 = vmatprep.subr.mxu0 0.0
    %319 = vmatpush2.msra.mxu0 0.0
    %320 = vmatprep.subr.mxu0 0.0
    %321 = vmatpush2.msra.mxu0 0.0
    %322 = vmatprep.subr.mxu0 0.0
    %323 = vmatpush2.msra.mxu0 0.0
    %324 = vmatprep.subr.mxu0 0.0
    %325 = vmatpush2.msra.mxu0 0.0
    %326 = vmatprep.subr.mxu0 0.0
    %327 = vmatpush2.msra.mxu0 0.0
    %328 = vmatprep.subr.mxu0 0.0
    %329 = vmatpush2.msra.mxu0 0.0
    %330 = vmatprep.subr.mxu0 0.0
    %331 = vmatpush2.msra.mxu0 0.0
    %332 = vmatprep.subr.mxu0 0.0
    %333 = vmatpush2.msra.mxu0 0.0
    %334 = vmatprep.subr.mxu0 0.0
    %335 = vmatpush2.msra.mxu0 0.0
    %336 = vmatprep.subr.mxu0 0.0
    %337 = vmatpush2.msra.mxu0 0.0
    %338 = vmatprep.mubr.f32.mxu0 0.0
    %339 = vmatmul.mubr.f32.gmra.mxu0 %v272
    %v340 = vpop.f32.mrf.mxu0
    %v341 = vadd.f32 0.0, %v340
    %v342 = vpop.f32.mrf.mxu0
    %343 = vdwg.mxu0
    %v345 = vrot.slane %v341, 7
    %v347 = vadd.f32 %v156, %v345
    %v348 = vxor.u32 %v347, 2147483648
    %v349 = vmul.f32 %v348, 1.442695
    %v350 = vpow.pop %v349
    %v351 = vadd.f32 %v350, 1.0
    %v352 = vrcp.pop %v351
    %v353 = vmul.f32 1.0, %v352
    %v354 = vtanh.pop %v347
    %v356 = vrot.slane %v262, 7
    %v358 = vmul.f32 %v353, %v356
    %360 = vrot.lane.b32.xlu0 %v354, 64
    %v361 = vpop.permute.xlu0 %360
    %v363 = vmul.f32 %v353, %v361
    %365 = vrot.lane.b32.xlu0 %v363, 32
    %v366 = vpop.permute.xlu0 %365
    %v368 = vadd.f32 %v358, %v366
    %v369 = vtanh.pop %v368
    %371 = vrot.lane.b32.xlu0 %v369, 64
    %v372 = vpop.permute.xlu0 %371
    %v374 = vmul.f32 %v353, %v372
    %v376 = vrot.slane %v374, 1
    %377 = vrot.lane.b32.xlu0 %v376, 32
    %v378 = vpop.permute.xlu0 %377
    %v379 = vsel %vm162, %v378, 0
    %381 = vmatprep.subr.mxu0 0.0
    %382 = vmatpush1.msra.mxu0 0.0
    %383 = vmatprep.subr.mxu0 0.0
    %384 = vmatpush1.msra.mxu0 0.0
    %385 = vmatprep.subr.mxu0 0.0
    %386 = vmatpush1.msra.mxu0 0.0
    %387 = vmatprep.subr.mxu0 0.0
    %388 = vmatpush1.msra.mxu0 0.0
    %389 = vmatprep.subr.mxu0 0.0
    %390 = vmatpush1.msra.mxu0 0.0
    %391 = vmatprep.subr.mxu0 0.0
    %392 = vmatpush1.msra.mxu0 0.0
    %393 = vmatprep.subr.mxu0 0.0
    %394 = vmatpush1.msra.mxu0 0.0
    %395 = vmatprep.subr.mxu0 0.0
    %396 = vmatpush1.msra.mxu0 0.0
    %397 = vmatprep.subr.mxu0 0.0
    %398 = vmatpush1.msra.mxu0 0.0
    %399 = vmatprep.subr.mxu0 0.0
    %400 = vmatpush1.msra.mxu0 0.0
    %401 = vmatprep.subr.mxu0 0.0
    %402 = vmatpush1.msra.mxu0 0.0
    %403 = vmatprep.subr.mxu0 0.0
    %404 = vmatpush1.msra.mxu0 0.0
    %405 = vmatprep.subr.mxu0 0.0
    %406 = vmatpush1.msra.mxu0 %v68
    %407 = vmatprep.subr.mxu0 0.0
    %408 = vmatpush1.msra.mxu0 %v67
    %409 = vmatprep.subr.mxu0 0.0
    %410 = vmatpush1.msra.mxu0 %v66
    %411 = vmatprep.subr.mxu0 0.0
    %412 = vmatpush1.msra.mxu0 %v65
    %413 = vmatprep.subr.mxu0 0.0
    %414 = vmatpush2.msra.mxu0 0.0
    %415 = vmatprep.subr.mxu0 0.0
    %416 = vmatpush2.msra.mxu0 0.0
    %417 = vmatprep.subr.mxu0 0.0
    %418 = vmatpush2.msra.mxu0 0.0
    %419 = vmatprep.subr.mxu0 0.0
    %420 = vmatpush2.msra.mxu0 0.0
    %421 = vmatprep.subr.mxu0 0.0
    %422 = vmatpush2.msra.mxu0 0.0
    %423 = vmatprep.subr.mxu0 0.0
    %424 = vmatpush2.msra.mxu0 0.0
    %425 = vmatprep.subr.mxu0 0.0
    %426 = vmatpush2.msra.mxu0 0.0
    %427 = vmatprep.subr.mxu0 0.0
    %428 = vmatpush2.msra.mxu0 0.0
    %429 = vmatprep.subr.mxu0 0.0
    %430 = vmatpush2.msra.mxu0 0.0
    %431 = vmatprep.subr.mxu0 0.0
    %432 = vmatpush2.msra.mxu0 0.0
    %433 = vmatprep.subr.mxu0 0.0
    %434 = vmatpush2.msra.mxu0 0.0
    %435 = vmatprep.subr.mxu0 0.0
    %436 = vmatpush2.msra.mxu0 0.0
    %437 = vmatprep.subr.mxu0 0.0
    %438 = vmatpush2.msra.mxu0 0.0
    %439 = vmatprep.subr.mxu0 0.0
    %440 = vmatpush2.msra.mxu0 0.0
    %441 = vmatprep.subr.mxu0 0.0
    %442 = vmatpush2.msra.mxu0 0.0
    %443 = vmatprep.subr.mxu0 0.0
    %444 = vmatpush2.msra.mxu0 0.0
    %445 = vmatprep.mubr.f32.mxu0 0.0
    %446 = vmatmul.mubr.f32.gmra.mxu0 %v379
    %v447 = vpop.f32.mrf.mxu0
    %v448 = vadd.f32 0.0, %v447
    %v449 = vpop.f32.mrf.mxu0
    %450 = vdwg.mxu0
    %v452 = vrot.slane %v448, 6
    %v454 = vadd.f32 %v156, %v452
    %v455 = vxor.u32 %v454, 2147483648
    %v456 = vmul.f32 %v455, 1.442695
    %v457 = vpow.pop %v456
    %v458 = vadd.f32 %v457, 1.0
    %v459 = vrcp.pop %v458
    %v460 = vmul.f32 1.0, %v459
    %v461 = vtanh.pop %v454
    %v463 = vrot.slane %v368, 7
    %v465 = vmul.f32 %v460, %v463
    %467 = vrot.lane.b32.xlu0 %v461, 64
    %v468 = vpop.permute.xlu0 %467
    %v470 = vmul.f32 %v460, %v468
    %472 = vrot.lane.b32.xlu0 %v470, 32
    %v473 = vpop.permute.xlu0 %472
    %v475 = vadd.f32 %v465, %v473
    %v476 = vtanh.pop %v475
    %478 = vrot.lane.b32.xlu0 %v476, 64
    %v479 = vpop.permute.xlu0 %478
    %v481 = vmul.f32 %v460, %v479
    %v483 = vrot.slane %v481, 2
    %484 = vrot.lane.b32.xlu0 %v483, 32
    %v485 = vpop.permute.xlu0 %484
    %v486 = vsel %vm162, %v485, 0
    %488 = vmatprep.subr.mxu0 0.0
    %489 = vmatpush1.msra.mxu0 0.0
    %490 = vmatprep.subr.mxu0 0.0
    %491 = vmatpush1.msra.mxu0 0.0
    %492 = vmatprep.subr.mxu0 0.0
    %493 = vmatpush1.msra.mxu0 0.0
    %494 = vmatprep.subr.mxu0 0.0
    %495 = vmatpush1.msra.mxu0 0.0
    %496 = vmatprep.subr.mxu0 0.0
    %497 = vmatpush1.msra.mxu0 0.0
    %498 = vmatprep.subr.mxu0 0.0
    %499 = vmatpush1.msra.mxu0 0.0
    %500 = vmatprep.subr.mxu0 0.0
    %501 = vmatpush1.msra.mxu0 0.0
    %502 = vmatprep.subr.mxu0 0.0
    %503 = vmatpush1.msra.mxu0 0.0
    %504 = vmatprep.subr.mxu0 0.0
    %505 = vmatpush1.msra.mxu0 0.0
    %506 = vmatprep.subr.mxu0 0.0
    %507 = vmatpush1.msra.mxu0 0.0
    %508 = vmatprep.subr.mxu0 0.0
    %509 = vmatpush1.msra.mxu0 0.0
    %510 = vmatprep.subr.mxu0 0.0
    %511 = vmatpush1.msra.mxu0 0.0
    %512 = vmatprep.subr.mxu0 0.0
    %513 = vmatpush1.msra.mxu0 %v68
    %514 = vmatprep.subr.mxu0 0.0
    %515 = vmatpush1.msra.mxu0 %v67
    %516 = vmatprep.subr.mxu0 0.0
    %517 = vmatpush1.msra.mxu0 %v66
    %518 = vmatprep.subr.mxu0 0.0
    %519 = vmatpush1.msra.mxu0 %v65
    %520 = vmatprep.subr.mxu0 0.0
    %521 = vmatpush2.msra.mxu0 0.0
    %522 = vmatprep.subr.mxu0 0.0
    %523 = vmatpush2.msra.mxu0 0.0
    %524 = vmatprep.subr.mxu0 0.0
    %525 = vmatpush2.msra.mxu0 0.0
    %526 = vmatprep.subr.mxu0 0.0
    %527 = vmatpush2.msra.mxu0 0.0
    %528 = vmatprep.subr.mxu0 0.0
    %529 = vmatpush2.msra.mxu0 0.0
    %530 = vmatprep.subr.mxu0 0.0
    %531 = vmatpush2.msra.mxu0 0.0
    %532 = vmatprep.subr.mxu0 0.0
    %533 = vmatpush2.msra.mxu0 0.0
    %534 = vmatprep.subr.mxu0 0.0
    %535 = vmatpush2.msra.mxu0 0.0
    %536 = vmatprep.subr.mxu0 0.0
    %537 = vmatpush2.msra.mxu0 0.0
    %538 = vmatprep.subr.mxu0 0.0
    %539 = vmatpush2.msra.mxu0 0.0
    %540 = vmatprep.subr.mxu0 0.0
    %541 = vmatpush2.msra.mxu0 0.0
    %542 = vmatprep.subr.mxu0 0.0
    %543 = vmatpush2.msra.mxu0 0.0
    %544 = vmatprep.subr.mxu0 0.0
    %545 = vmatpush2.msra.mxu0 0.0
    %546 = vmatprep.subr.mxu0 0.0
    %547 = vmatpush2.msra.mxu0 0.0
    %548 = vmatprep.subr.mxu0 0.0
    %549 = vmatpush2.msra.mxu0 0.0
    %550 = vmatprep.subr.mxu0 0.0
    %551 = vmatpush2.msra.mxu0 0.0
    %552 = vmatprep.mubr.f32.mxu0 0.0
    %553 = vmatmul.mubr.f32.gmra.mxu0 %v486
    %v554 = vpop.f32.mrf.mxu0
    %v555 = vadd.f32 0.0, %v554
    %v556 = vpop.f32.mrf.mxu0
    %557 = vdwg.mxu0
    %v559 = vrot.slane %v555, 5
    %v561 = vadd.f32 %v156, %v559
    %v562 = vxor.u32 %v561, 2147483648
    %v563 = vmul.f32 %v562, 1.442695
    %v564 = vpow.pop %v563
    %v565 = vadd.f32 %v564, 1.0
    %v566 = vrcp.pop %v565
    %v567 = vmul.f32 1.0, %v566
    %v568 = vtanh.pop %v561
    %v570 = vrot.slane %v475, 7
    %v572 = vmul.f32 %v567, %v570
    %574 = vrot.lane.b32.xlu0 %v568, 64
    %v575 = vpop.permute.xlu0 %574
    %v577 = vmul.f32 %v567, %v575
    %579 = vrot.lane.b32.xlu0 %v577, 32
    %v580 = vpop.permute.xlu0 %579
    %v582 = vadd.f32 %v572, %v580
    %v583 = vtanh.pop %v582
    %585 = vrot.lane.b32.xlu0 %v583, 64
    %v586 = vpop.permute.xlu0 %585
    %v588 = vmul.f32 %v567, %v586
    %v590 = vrot.slane %v588, 3
    %591 = vrot.lane.b32.xlu0 %v590, 32
    %v592 = vpop.permute.xlu0 %591
    %v593 = vsel %vm162, %v592, 0
    %595 = vmatprep.subr.mxu0 0.0
    %596 = vmatpush1.msra.mxu0 0.0
    %597 = vmatprep.subr.mxu0 0.0
    %598 = vmatpush1.msra.mxu0 0.0
    %599 = vmatprep.subr.mxu0 0.0
    %600 = vmatpush1.msra.mxu0 0.0
    %601 = vmatprep.subr.mxu0 0.0
    %602 = vmatpush1.msra.mxu0 0.0
    %603 = vmatprep.subr.mxu0 0.0
    %604 = vmatpush1.msra.mxu0 0.0
    %605 = vmatprep.subr.mxu0 0.0
    %606 = vmatpush1.msra.mxu0 0.0
    %607 = vmatprep.subr.mxu0 0.0
    %608 = vmatpush1.msra.mxu0 0.0
    %609 = vmatprep.subr.mxu0 0.0
    %610 = vmatpush1.msra.mxu0 0.0
    %611 = vmatprep.subr.mxu0 0.0
    %612 = vmatpush1.msra.mxu0 0.0
    %613 = vmatprep.subr.mxu0 0.0
    %614 = vmatpush1.msra.mxu0 0.0
    %615 = vmatprep.subr.mxu0 0.0
    %616 = vmatpush1.msra.mxu0 0.0
    %617 = vmatprep.subr.mxu0 0.0
    %618 = vmatpush1.msra.mxu0 0.0
    %619 = vmatprep.subr.mxu0 0.0
    %620 = vmatpush1.msra.mxu0 %v68
    %621 = vmatprep.subr.mxu0 0.0
    %622 = vmatpush1.msra.mxu0 %v67
    %623 = vmatprep.subr.mxu0 0.0
    %624 = vmatpush1.msra.mxu0 %v66
    %625 = vmatprep.subr.mxu0 0.0
    %626 = vmatpush1.msra.mxu0 %v65
    %627 = vmatprep.subr.mxu0 0.0
    %628 = vmatpush2.msra.mxu0 0.0
    %629 = vmatprep.subr.mxu0 0.0
    %630 = vmatpush2.msra.mxu0 0.0
    %631 = vmatprep.subr.mxu0 0.0
    %632 = vmatpush2.msra.mxu0 0.0
    %633 = vmatprep.subr.mxu0 0.0
    %634 = vmatpush2.msra.mxu0 0.0
    %635 = vmatprep.subr.mxu0 0.0
    %636 = vmatpush2.msra.mxu0 0.0
    %637 = vmatprep.subr.mxu0 0.0
    %638 = vmatpush2.msra.mxu0 0.0
    %639 = vmatprep.subr.mxu0 0.0
    %640 = vmatpush2.msra.mxu0 0.0
    %641 = vmatprep.subr.mxu0 0.0
    %642 = vmatpush2.msra.mxu0 0.0
    %643 = vmatprep.subr.mxu0 0.0
    %644 = vmatpush2.msra.mxu0 0.0
    %645 = vmatprep.subr.mxu0 0.0
    %646 = vmatpush2.msra.mxu0 0.0
    %647 = vmatprep.subr.mxu0 0.0
    %648 = vmatpush2.msra.mxu0 0.0
    %649 = vmatprep.subr.mxu0 0.0
    %650 = vmatpush2.msra.mxu0 0.0
    %651 = vmatprep.subr.mxu0 0.0
    %652 = vmatpush2.msra.mxu0 0.0
    %653 = vmatprep.subr.mxu0 0.0
    %654 = vmatpush2.msra.mxu0 0.0
    %655 = vmatprep.subr.mxu0 0.0
    %656 = vmatpush2.msra.mxu0 0.0
    %657 = vmatprep.subr.mxu0 0.0
    %658 = vmatpush2.msra.mxu0 0.0
    %659 = vmatprep.mubr.f32.mxu0 0.0
    %660 = vmatmul.mubr.f32.gmra.mxu0 %v593
    %v661 = vpop.f32.mrf.mxu0
    %v662 = vadd.f32 0.0, %v661
    %v663 = vpop.f32.mrf.mxu0
    %664 = vdwg.mxu0
    %v666 = vrot.slane %v662, 4
    %v668 = vadd.f32 %v156, %v666
    %v669 = vxor.u32 %v668, 2147483648
    %v670 = vmul.f32 %v669, 1.442695
    %v671 = vpow.pop %v670
    %v672 = vadd.f32 %v671, 1.0
    %v673 = vrcp.pop %v672
    %v674 = vmul.f32 1.0, %v673
    %v675 = vtanh.pop %v668
    %v677 = vrot.slane %v582, 7
    %v679 = vmul.f32 %v674, %v677
    %681 = vrot.lane.b32.xlu0 %v675, 64
    %v682 = vpop.permute.xlu0 %681
    %v684 = vmul.f32 %v674, %v682
    %686 = vrot.lane.b32.xlu0 %v684, 32
    %v687 = vpop.permute.xlu0 %686
    %v689 = vadd.f32 %v679, %v687
    %v690 = vtanh.pop %v689
    %692 = vrot.lane.b32.xlu0 %v690, 64
    %v693 = vpop.permute.xlu0 %692
    %v695 = vmul.f32 %v674, %v693
    %v697 = vrot.slane %v695, 4
    %698 = vrot.lane.b32.xlu0 %v697, 32
    %v699 = vpop.permute.xlu0 %698
    %v700 = vsel %vm162, %v699, 0
    %702 = vmatprep.subr.mxu0 0.0
    %703 = vmatpush1.msra.mxu0 0.0
    %704 = vmatprep.subr.mxu0 0.0
    %705 = vmatpush1.msra.mxu0 0.0
    %706 = vmatprep.subr.mxu0 0.0
    %707 = vmatpush1.msra.mxu0 0.0
    %708 = vmatprep.subr.mxu0 0.0
    %709 = vmatpush1.msra.mxu0 0.0
    %710 = vmatprep.subr.mxu0 0.0
    %711 = vmatpush1.msra.mxu0 0.0
    %712 = vmatprep.subr.mxu0 0.0
    %713 = vmatpush1.msra.mxu0 0.0
    %714 = vmatprep.subr.mxu0 0.0
    %715 = vmatpush1.msra.mxu0 0.0
    %716 = vmatprep.subr.mxu0 0.0
    %717 = vmatpush1.msra.mxu0 0.0
    %718 = vmatprep.subr.mxu0 0.0
    %719 = vmatpush1.msra.mxu0 0.0
    %720 = vmatprep.subr.mxu0 0.0
    %721 = vmatpush1.msra.mxu0 0.0
    %722 = vmatprep.subr.mxu0 0.0
    %723 = vmatpush1.msra.mxu0 0.0
    %724 = vmatprep.subr.mxu0 0.0
    %725 = vmatpush1.msra.mxu0 0.0
    %726 = vmatprep.subr.mxu0 0.0
    %727 = vmatpush1.msra.mxu0 %v68
    %728 = vmatprep.subr.mxu0 0.0
    %729 = vmatpush1.msra.mxu0 %v67
    %730 = vmatprep.subr.mxu0 0.0
    %731 = vmatpush1.msra.mxu0 %v66
    %732 = vmatprep.subr.mxu0 0.0
    %733 = vmatpush1.msra.mxu0 %v65
    %734 = vmatprep.subr.mxu0 0.0
    %735 = vmatpush2.msra.mxu0 0.0
    %736 = vmatprep.subr.mxu0 0.0
    %737 = vmatpush2.msra.mxu0 0.0
    %738 = vmatprep.subr.mxu0 0.0
    %739 = vmatpush2.msra.mxu0 0.0
    %740 = vmatprep.subr.mxu0 0.0
    %741 = vmatpush2.msra.mxu0 0.0
    %742 = vmatprep.subr.mxu0 0.0
    %743 = vmatpush2.msra.mxu0 0.0
    %744 = vmatprep.subr.mxu0 0.0
    %745 = vmatpush2.msra.mxu0 0.0
    %746 = vmatprep.subr.mxu0 0.0
    %747 = vmatpush2.msra.mxu0 0.0
    %748 = vmatprep.subr.mxu0 0.0
    %749 = vmatpush2.msra.mxu0 0.0
    %750 = vmatprep.subr.mxu0 0.0
    %751 = vmatpush2.msra.mxu0 0.0
    %752 = vmatprep.subr.mxu0 0.0
    %753 = vmatpush2.msra.mxu0 0.0
    %754 = vmatprep.subr.mxu0 0.0
    %755 = vmatpush2.msra.mxu0 0.0
    %756 = vmatprep.subr.mxu0 0.0
    %757 = vmatpush2.msra.mxu0 0.0
    %758 = vmatprep.subr.mxu0 0.0
    %759 = vmatpush2.msra.mxu0 0.0
    %760 = vmatprep.subr.mxu0 0.0
    %761 = vmatpush2.msra.mxu0 0.0
    %762 = vmatprep.subr.mxu0 0.0
    %763 = vmatpush2.msra.mxu0 0.0
    %764 = vmatprep.subr.mxu0 0.0
    %765 = vmatpush2.msra.mxu0 0.0
    %766 = vmatprep.mubr.f32.mxu0 0.0
    %767 = vmatmul.mubr.f32.gmra.mxu0 %v700
    %v768 = vpop.f32.mrf.mxu0
    %v769 = vadd.f32 0.0, %v768
    %v770 = vpop.f32.mrf.mxu0
    %771 = vdwg.mxu0
    %v773 = vrot.slane %v769, 3
    %v775 = vadd.f32 %v156, %v773
    %v776 = vxor.u32 %v775, 2147483648
    %v777 = vmul.f32 %v776, 1.442695
    %v778 = vpow.pop %v777
    %v779 = vadd.f32 %v778, 1.0
    %v780 = vrcp.pop %v779
    %v781 = vmul.f32 1.0, %v780
    %v782 = vtanh.pop %v775
    %v784 = vrot.slane %v689, 7
    %v786 = vmul.f32 %v781, %v784
    %788 = vrot.lane.b32.xlu0 %v782, 64
    %v789 = vpop.permute.xlu0 %788
    %v791 = vmul.f32 %v781, %v789
    %793 = vrot.lane.b32.xlu0 %v791, 32
    %v794 = vpop.permute.xlu0 %793
    %v796 = vadd.f32 %v786, %v794
    %v797 = vtanh.pop %v796
    %799 = vrot.lane.b32.xlu0 %v797, 64
    %v800 = vpop.permute.xlu0 %799
    %v802 = vmul.f32 %v781, %v800
    %v804 = vrot.slane %v802, 5
    %805 = vrot.lane.b32.xlu0 %v804, 32
    %v806 = vpop.permute.xlu0 %805
    %v807 = vsel %vm162, %v806, 0
    %809 = vmatprep.subr.mxu0 0.0
    %810 = vmatpush1.msra.mxu0 0.0
    %811 = vmatprep.subr.mxu0 0.0
    %812 = vmatpush1.msra.mxu0 0.0
    %813 = vmatprep.subr.mxu0 0.0
    %814 = vmatpush1.msra.mxu0 0.0
    %815 = vmatprep.subr.mxu0 0.0
    %816 = vmatpush1.msra.mxu0 0.0
    %817 = vmatprep.subr.mxu0 0.0
    %818 = vmatpush1.msra.mxu0 0.0
    %819 = vmatprep.subr.mxu0 0.0
    %820 = vmatpush1.msra.mxu0 0.0
    %821 = vmatprep.subr.mxu0 0.0
    %822 = vmatpush1.msra.mxu0 0.0
    %823 = vmatprep.subr.mxu0 0.0
    %824 = vmatpush1.msra.mxu0 0.0
    %825 = vmatprep.subr.mxu0 0.0
    %826 = vmatpush1.msra.mxu0 0.0
    %827 = vmatprep.subr.mxu0 0.0
    %828 = vmatpush1.msra.mxu0 0.0
    %829 = vmatprep.subr.mxu0 0.0
    %830 = vmatpush1.msra.mxu0 0.0
    %831 = vmatprep.subr.mxu0 0.0
    %832 = vmatpush1.msra.mxu0 0.0
    %833 = vmatprep.subr.mxu0 0.0
    %834 = vmatpush1.msra.mxu0 %v68
    %835 = vmatprep.subr.mxu0 0.0
    %836 = vmatpush1.msra.mxu0 %v67
    %837 = vmatprep.subr.mxu0 0.0
    %838 = vmatpush1.msra.mxu0 %v66
    %839 = vmatprep.subr.mxu0 0.0
    %840 = vmatpush1.msra.mxu0 %v65
    %841 = vmatprep.subr.mxu0 0.0
    %842 = vmatpush2.msra.mxu0 0.0
    %843 = vmatprep.subr.mxu0 0.0
    %844 = vmatpush2.msra.mxu0 0.0
    %845 = vmatprep.subr.mxu0 0.0
    %846 = vmatpush2.msra.mxu0 0.0
    %847 = vmatprep.subr.mxu0 0.0
    %848 = vmatpush2.msra.mxu0 0.0
    %849 = vmatprep.subr.mxu0 0.0
    %850 = vmatpush2.msra.mxu0 0.0
    %851 = vmatprep.subr.mxu0 0.0
    %852 = vmatpush2.msra.mxu0 0.0
    %853 = vmatprep.subr.mxu0 0.0
    %854 = vmatpush2.msra.mxu0 0.0
    %855 = vmatprep.subr.mxu0 0.0
    %856 = vmatpush2.msra.mxu0 0.0
    %857 = vmatprep.subr.mxu0 0.0
    %858 = vmatpush2.msra.mxu0 0.0
    %859 = vmatprep.subr.mxu0 0.0
    %860 = vmatpush2.msra.mxu0 0.0
    %861 = vmatprep.subr.mxu0 0.0
    %862 = vmatpush2.msra.mxu0 0.0
    %863 = vmatprep.subr.mxu0 0.0
    %864 = vmatpush2.msra.mxu0 0.0
    %865 = vmatprep.subr.mxu0 0.0
    %866 = vmatpush2.msra.mxu0 0.0
    %867 = vmatprep.subr.mxu0 0.0
    %868 = vmatpush2.msra.mxu0 0.0
    %869 = vmatprep.subr.mxu0 0.0
    %870 = vmatpush2.msra.mxu0 0.0
    %871 = vmatprep.subr.mxu0 0.0
    %872 = vmatpush2.msra.mxu0 0.0
    %873 = vmatprep.mubr.f32.mxu0 0.0
    %874 = vmatmul.mubr.f32.gmra.mxu0 %v807
    %v875 = vpop.f32.mrf.mxu0
    %v876 = vadd.f32 0.0, %v875
    %v877 = vpop.f32.mrf.mxu0
    %878 = vdwg.mxu0
    %v880 = vrot.slane %v876, 2
    %v882 = vadd.f32 %v156, %v880
    %v883 = vxor.u32 %v882, 2147483648
    %v884 = vmul.f32 %v883, 1.442695
    %v885 = vpow.pop %v884
    %v886 = vadd.f32 %v885, 1.0
    %v887 = vrcp.pop %v886
    %v888 = vmul.f32 1.0, %v887
    %v889 = vtanh.pop %v882
    %v891 = vrot.slane %v796, 7
    %v893 = vmul.f32 %v888, %v891
    %895 = vrot.lane.b32.xlu0 %v889, 64
    %v896 = vpop.permute.xlu0 %895
    %v898 = vmul.f32 %v888, %v896
    %900 = vrot.lane.b32.xlu0 %v898, 32
    %v901 = vpop.permute.xlu0 %900
    %v903 = vadd.f32 %v893, %v901
    %v904 = vtanh.pop %v903
    %906 = vrot.lane.b32.xlu0 %v904, 64
    %v907 = vpop.permute.xlu0 %906
    %v909 = vmul.f32 %v888, %v907
    %v911 = vrot.slane %v909, 6
    %912 = vrot.lane.b32.xlu0 %v911, 32
    %v913 = vpop.permute.xlu0 %912
    %v914 = vsel %vm162, %v913, 0
    %916 = vmatprep.subr.mxu0 0.0
    %917 = vmatpush1.msra.mxu0 0.0
    %918 = vmatprep.subr.mxu0 0.0
    %919 = vmatpush1.msra.mxu0 0.0
    %920 = vmatprep.subr.mxu0 0.0
    %921 = vmatpush1.msra.mxu0 0.0
    %922 = vmatprep.subr.mxu0 0.0
    %923 = vmatpush1.msra.mxu0 0.0
    %924 = vmatprep.subr.mxu0 0.0
    %925 = vmatpush1.msra.mxu0 0.0
    %926 = vmatprep.subr.mxu0 0.0
    %927 = vmatpush1.msra.mxu0 0.0
    %928 = vmatprep.subr.mxu0 0.0
    %929 = vmatpush1.msra.mxu0 0.0
    %930 = vmatprep.subr.mxu0 0.0
    %931 = vmatpush1.msra.mxu0 0.0
    %932 = vmatprep.subr.mxu0 0.0
    %933 = vmatpush1.msra.mxu0 0.0
    %934 = vmatprep.subr.mxu0 0.0
    %935 = vmatpush1.msra.mxu0 0.0
    %936 = vmatprep.subr.mxu0 0.0
    %937 = vmatpush1.msra.mxu0 0.0
    %938 = vmatprep.subr.mxu0 0.0
    %939 = vmatpush1.msra.mxu0 0.0
    %940 = vmatprep.subr.mxu0 0.0
    %941 = vmatpush1.msra.mxu0 %v68
    %942 = vmatprep.subr.mxu0 0.0
    %943 = vmatpush1.msra.mxu0 %v67
    %944 = vmatprep.subr.mxu0 0.0
    %945 = vmatpush1.msra.mxu0 %v66
    %946 = vmatprep.subr.mxu0 0.0
    %947 = vmatpush1.msra.mxu0 %v65
    %948 = vmatprep.subr.mxu0 0.0
    %949 = vmatpush2.msra.mxu0 0.0
    %950 = vmatprep.subr.mxu0 0.0
    %951 = vmatpush2.msra.mxu0 0.0
    %952 = vmatprep.subr.mxu0 0.0
    %953 = vmatpush2.msra.mxu0 0.0
    %954 = vmatprep.subr.mxu0 0.0
    %955 = vmatpush2.msra.mxu0 0.0
    %956 = vmatprep.subr.mxu0 0.0
    %957 = vmatpush2.msra.mxu0 0.0
    %958 = vmatprep.subr.mxu0 0.0
    %959 = vmatpush2.msra.mxu0 0.0
    %960 = vmatprep.subr.mxu0 0.0
    %961 = vmatpush2.msra.mxu0 0.0
    %962 = vmatprep.subr.mxu0 0.0
    %963 = vmatpush2.msra.mxu0 0.0
    %964 = vmatprep.subr.mxu0 0.0
    %965 = vmatpush2.msra.mxu0 0.0
    %966 = vmatprep.subr.mxu0 0.0
    %967 = vmatpush2.msra.mxu0 0.0
    %968 = vmatprep.subr.mxu0 0.0
    %969 = vmatpush2.msra.mxu0 0.0
    %970 = vmatprep.subr.mxu0 0.0
    %971 = vmatpush2.msra.mxu0 0.0
    %972 = vmatprep.subr.mxu0 0.0
    %973 = vmatpush2.msra.mxu0 0.0
    %974 = vmatprep.subr.mxu0 0.0
    %975 = vmatpush2.msra.mxu0 0.0
    %976 = vmatprep.subr.mxu0 0.0
    %977 = vmatpush2.msra.mxu0 0.0
    %978 = vmatprep.subr.mxu0 0.0
    %979 = vmatpush2.msra.mxu0 0.0
    %980 = vmatprep.mubr.f32.mxu0 0.0
    %981 = vmatmul.mubr.f32.gmra.mxu0 %v914
    %v982 = vpop.f32.mrf.mxu0
    %v983 = vadd.f32 0.0, %v982
    %v984 = vpop.f32.mrf.mxu0
    %985 = vdwg.mxu0
    %v987 = vrot.slane %v983, 1
    %v989 = vadd.f32 %v156, %v987
    %v990 = vxor.u32 %v989, 2147483648
    %v991 = vmul.f32 %v990, 1.442695
    %v992 = vpow.pop %v991
    %v993 = vadd.f32 %v992, 1.0
    %v994 = vrcp.pop %v993
    %v995 = vmul.f32 1.0, %v994
    %v996 = vtanh.pop %v989
    %v998 = vrot.slane %v903, 7
    %v1000 = vmul.f32 %v995, %v998
    %1002 = vrot.lane.b32.xlu0 %v996, 64
    %v1003 = vpop.permute.xlu0 %1002
    %v1005 = vmul.f32 %v995, %v1003
    %1007 = vrot.lane.b32.xlu0 %v1005, 32
    %v1008 = vpop.permute.xlu0 %1007
    %v1010 = vadd.f32 %v1000, %v1008
    %v1011 = vtanh.pop %v1010
    %1013 = vrot.lane.b32.xlu0 %v1011, 64
    %v1014 = vpop.permute.xlu0 %1013
    %v1016 = vmul.f32 %v995, %v1014
    %vm1017 = vcmask 1040384
    %v1018 = vsel %vm1017, %v268, %v374
    %vm1019 = vcmask 1041408
    %v1020 = vsel %vm1019, %v1018, %v481
    %vm1021 = vcmask 1042432
    %v1022 = vsel %vm1021, %v1020, %v588
    %vm1023 = vcmask 1043456
    %v1024 = vsel %vm1023, %v1022, %v695
    %vm1025 = vcmask 1044480
    %v1026 = vsel %vm1025, %v1024, %v802
    %vm1027 = vcmask 1045504
    %v1028 = vsel %vm1027, %v1026, %v909
    %vm1029 = vcmask 1046528
    %v1030 = vsel %vm1029, %v1028, %v1016
    %1032 = vrot.lane.b32.xlu0 %v158, 96
    %v1033 = vpop.permute.xlu0 %1032
    %v1035 = vadd.f32 %v1030, %v1033
    %v1036 = vld [vmem:[%s6] sm:$0xff]
    %v1037 = vld [vmem:[%s6 + $0x8] sm:$0xff]
    %v1038 = vld [vmem:[%s6 + $0x10] sm:$0xff]
    %v1039 = vld [vmem:[%s6 + $0x18] sm:$0xff]
    %v1040 = vld [vmem:[#allocation6] sm:$0x1]
    %v1042 = vlaneseq
    %v1043 = vshrl.u32 %v1042, 7
    %v1044 = vsub.s32 0, %v1043
    %v1045 = vrot.slane %v1040, %v1044
    %1048 = vrot.lane.b32.xlu0 %v1035, 32
    %v1049 = vpop.permute.xlu0 %1048
    %v1050 = vsel %vm162, %v1049, 0
    %1052 = vmatprep.subr.mxu0 0.0
    %1053 = vmatpush1.msra.mxu0 0.0
    %1054 = vmatprep.subr.mxu0 0.0
    %1055 = vmatpush1.msra.mxu0 0.0
    %1056 = vmatprep.subr.mxu0 0.0
    %1057 = vmatpush1.msra.mxu0 0.0
    %1058 = vmatprep.subr.mxu0 0.0
    %1059 = vmatpush1.msra.mxu0 0.0
    %1060 = vmatprep.subr.mxu0 0.0
    %1061 = vmatpush1.msra.mxu0 0.0
    %1062 = vmatprep.subr.mxu0 0.0
    %1063 = vmatpush1.msra.mxu0 0.0
    %1064 = vmatprep.subr.mxu0 0.0
    %1065 = vmatpush1.msra.mxu0 0.0
    %1066 = vmatprep.subr.mxu0 0.0
    %1067 = vmatpush1.msra.mxu0 0.0
    %1068 = vmatprep.subr.mxu0 0.0
    %1069 = vmatpush1.msra.mxu0 0.0
    %1070 = vmatprep.subr.mxu0 0.0
    %1071 = vmatpush1.msra.mxu0 0.0
    %1072 = vmatprep.subr.mxu0 0.0
    %1073 = vmatpush1.msra.mxu0 0.0
    %1074 = vmatprep.subr.mxu0 0.0
    %1075 = vmatpush1.msra.mxu0 0.0
    %1076 = vmatprep.subr.mxu0 0.0
    %1077 = vmatpush1.msra.mxu0 %v1039
    %1078 = vmatprep.subr.mxu0 0.0
    %1079 = vmatpush1.msra.mxu0 %v1038
    %1080 = vmatprep.subr.mxu0 0.0
    %1081 = vmatpush1.msra.mxu0 %v1037
    %1082 = vmatprep.subr.mxu0 0.0
    %1083 = vmatpush1.msra.mxu0 %v1036
    %1084 = vmatprep.subr.mxu0 0.0
    %1085 = vmatpush2.msra.mxu0 0.0
    %1086 = vmatprep.subr.mxu0 0.0
    %1087 = vmatpush2.msra.mxu0 0.0
    %1088 = vmatprep.subr.mxu0 0.0
    %1089 = vmatpush2.msra.mxu0 0.0
    %1090 = vmatprep.subr.mxu0 0.0
    %1091 = vmatpush2.msra.mxu0 0.0
    %1092 = vmatprep.subr.mxu0 0.0
    %1093 = vmatpush2.msra.mxu0 0.0
    %1094 = vmatprep.subr.mxu0 0.0
    %1095 = vmatpush2.msra.mxu0 0.0
    %1096 = vmatprep.subr.mxu0 0.0
    %1097 = vmatpush2.msra.mxu0 0.0
    %1098 = vmatprep.subr.mxu0 0.0
    %1099 = vmatpush2.msra.mxu0 0.0
    %1100 = vmatprep.subr.mxu0 0.0
    %1101 = vmatpush2.msra.mxu0 0.0
    %1102 = vmatprep.subr.mxu0 0.0
    %1103 = vmatpush2.msra.mxu0 0.0
    %1104 = vmatprep.subr.mxu0 0.0
    %1105 = vmatpush2.msra.mxu0 0.0
    %1106 = vmatprep.subr.mxu0 0.0
    %1107 = vmatpush2.msra.mxu0 0.0
    %1108 = vmatprep.subr.mxu0 0.0
    %1109 = vmatpush2.msra.mxu0 0.0
    %1110 = vmatprep.subr.mxu0 0.0
    %1111 = vmatpush2.msra.mxu0 0.0
    %1112 = vmatprep.subr.mxu0 0.0
    %1113 = vmatpush2.msra.mxu0 0.0
    %1114 = vmatprep.subr.mxu0 0.0
    %1115 = vmatpush2.msra.mxu0 0.0
    %1116 = vmatprep.mubr.f32.mxu0 0.0
    %1117 = vmatmul.mubr.f32.gmra.mxu0 %v1050
    %v1118 = vpop.f32.mrf.mxu0
    %v1119 = vadd.f32 %v1045, %v1118
    %v1120 = vpop.f32.mrf.mxu0
    %1121 = vdwg.mxu0
    %v1122 = vmax.f32 %v1119, 0.0
    %v1123 = vld [vmem:[%s8] sm:$0xff]
    %v1124 = vld [vmem:[%s8 + $0x8] sm:$0xff]
    %v1125 = vld [vmem:[#allocation2] sm:$0x1]
    %v1127 = vlaneseq
    %v1128 = vshrl.u32 %v1127, 7
    %v1129 = vsub.s32 0, %v1128
    %v1130 = vrot.slane %v1125, %v1129
    %v1133 = vsel %vm85, %v1122, 0
    %1135 = vmatprep.subr.mxu0 0.0
    %1136 = vmatpush1.msra.mxu0 0.0
    %1137 = vmatprep.subr.mxu0 0.0
    %1138 = vmatpush1.msra.mxu0 0.0
    %1139 = vmatprep.subr.mxu0 0.0
    %1140 = vmatpush1.msra.mxu0 0.0
    %1141 = vmatprep.subr.mxu0 0.0
    %1142 = vmatpush1.msra.mxu0 0.0
    %1143 = vmatprep.subr.mxu0 0.0
    %1144 = vmatpush1.msra.mxu0 0.0
    %1145 = vmatprep.subr.mxu0 0.0
    %1146 = vmatpush1.msra.mxu0 0.0
    %1147 = vmatprep.subr.mxu0 0.0
    %1148 = vmatpush1.msra.mxu0 0.0
    %1149 = vmatprep.subr.mxu0 0.0
    %1150 = vmatpush1.msra.mxu0 0.0
    %1151 = vmatprep.subr.mxu0 0.0
    %1152 = vmatpush1.msra.mxu0 0.0
    %1153 = vmatprep.subr.mxu0 0.0
    %1154 = vmatpush1.msra.mxu0 0.0
    %1155 = vmatprep.subr.mxu0 0.0
    %1156 = vmatpush1.msra.mxu0 0.0
    %1157 = vmatprep.subr.mxu0 0.0
    %1158 = vmatpush1.msra.mxu0 0.0
    %1159 = vmatprep.subr.mxu0 0.0
    %1160 = vmatpush1.msra.mxu0 0.0
    %1161 = vmatprep.subr.mxu0 0.0
    %1162 = vmatpush1.msra.mxu0 0.0
    %1163 = vmatprep.subr.mxu0 0.0
    %1164 = vmatpush1.msra.mxu0 %v1124
    %1165 = vmatprep.subr.mxu0 0.0
    %1166 = vmatpush1.msra.mxu0 %v1123
    %1167 = vmatprep.subr.mxu0 0.0
    %1168 = vmatpush2.msra.mxu0 0.0
    %1169 = vmatprep.subr.mxu0 0.0
    %1170 = vmatpush2.msra.mxu0 0.0
    %1171 = vmatprep.subr.mxu0 0.0
    %1172 = vmatpush2.msra.mxu0 0.0
    %1173 = vmatprep.subr.mxu0 0.0
    %1174 = vmatpush2.msra.mxu0 0.0
    %1175 = vmatprep.subr.mxu0 0.0
    %1176 = vmatpush2.msra.mxu0 0.0
    %1177 = vmatprep.subr.mxu0 0.0
    %1178 = vmatpush2.msra.mxu0 0.0
    %1179 = vmatprep.subr.mxu0 0.0
    %1180 = vmatpush2.msra.mxu0 0.0
    %1181 = vmatprep.subr.mxu0 0.0
    %1182 = vmatpush2.msra.mxu0 0.0
    %1183 = vmatprep.subr.mxu0 0.0
    %1184 = vmatpush2.msra.mxu0 0.0
    %1185 = vmatprep.subr.mxu0 0.0
    %1186 = vmatpush2.msra.mxu0 0.0
    %1187 = vmatprep.subr.mxu0 0.0
    %1188 = vmatpush2.msra.mxu0 0.0
    %1189 = vmatprep.subr.mxu0 0.0
    %1190 = vmatpush2.msra.mxu0 0.0
    %1191 = vmatprep.subr.mxu0 0.0
    %1192 = vmatpush2.msra.mxu0 0.0
    %1193 = vmatprep.subr.mxu0 0.0
    %1194 = vmatpush2.msra.mxu0 0.0
    %1195 = vmatprep.subr.mxu0 0.0
    %1196 = vmatpush2.msra.mxu0 0.0
    %1197 = vmatprep.subr.mxu0 0.0
    %1198 = vmatpush2.msra.mxu0 0.0
    %1199 = vmatprep.mubr.f32.mxu0 0.0
    %1200 = vmatmul.mubr.f32.gmra.mxu0 %v1133
    %v1201 = vpop.f32.mrf.mxu0
    %v1202 = vadd.f32 %v1130, %v1201
    %v1203 = vpop.f32.mrf.mxu0
    %1204 = vdwg.mxu0
    %vm1205 = vcmask 7168
    %1206 = vst.msk [vmem:[%s10] sm:$0xff] %vm1205, %v1202
    %v1207 = vsel %vm1205, %v1202, 0.0
    %v1208 = vrot.slane %v1207, 4
    %v1209 = vadd.f32 %v1207, %v1208
    %v1210 = vrot.slane %v1209, 2
    %v1211 = vadd.f32 %v1209, %v1210
    %v1212 = vrot.slane %v1211, 1
    %v1213 = vadd.f32 %v1211, %v1212
    %v1214 = vrcp.pop 8.0
    %v1215 = vmul.f32 %v1213, %v1214
    %vm1216 = vcmask 0
    %1217 = vst.msk [vmem:[#allocation8] sm:$0x1] %vm1216, %v1215
    // Predicated region
    $region50: #{lstm_asc_forward.1} parent=1 // pred_check
      _
    $region51: #{lstm_asc_forward.1} parent=1 // pred_check_branch
      %1219 = sbr.rel (0) target = $region53
    $region52: #{lstm_asc_forward.1} parent=1 // pred_region
      _
    $region53: #{lstm_asc_forward.1} parent=1 // pred_fallthru
      _
    // Predicated region
    $region54: #{lstm_asc_forward.1} parent=1 // pred_check
      _
    $region55: #{lstm_asc_forward.1} parent=1 // pred_check_branch
      %1221 = sbr.rel (0) target = $region57
    $region56: #{lstm_asc_forward.1} parent=1 // pred_region
      %s1223 = ssub.s32 16, 16
      %1224 = vsyncadd [#allocation5], %s1223
      %s1226 = sshll.u32 [#allocation8], 4
      %s1227 = int_to_ptr.vmem [resolvable:$true] %s1226
      %1229 = dma.vmem_to_hbm [thread:$0]  %s1227, 16, %s11, [#allocation5]
    $region57: #{lstm_asc_forward.1} parent=1 // pred_fallthru
      _
    // Predicated region
    $region58: #{lstm_asc_forward.1} parent=1 // pred_check
      _
    $region59: #{lstm_asc_forward.1} parent=1 // pred_check_branch
      %1231 = sbr.rel (0) target = $region61
    $region60: #{lstm_asc_forward.1} parent=1 // pred_region
      _
    $region61: #{lstm_asc_forward.1} parent=1 // pred_fallthru
      _
    // Predicated region
    $region62: #{lstm_asc_forward.1} parent=1 // pred_check
      _
    $region63: #{lstm_asc_forward.1} parent=1 // pred_check_branch
      %1233 = sbr.rel (0) target = $region65
    $region64: #{lstm_asc_forward.1} parent=1 // pred_region
      %1234 = dma.done [#allocation5], 16
    $region65: #{lstm_asc_forward.1} parent=1 // pred_fallthru
      _
    %1235 = vsyncpa [#allocation4], 1
    %1236 = vsyncpa [#allocation7], 1
    %1237 = vsyncpa [#allocation5], 1

</llo_original>
